<compile_context>
chip_gen: v5e
topology: v5e:2x2
jax: 0.10.0
libtpu: 0.0.40
codegen_flags: <defaults>
</compile_context>

<pallas_src>
import jax
import jax.numpy as jnp
from jax.experimental import pallas as pl
from jax.experimental.pallas import tpu as pltpu

LANE = 128


def _round_up(x, m):
    return ((x + m - 1) // m) * m


def _vmem_limit_bytes():
    """Per-generation scoped-VMEM limit (~3/4 of physical, capped at 100 MiB)."""
    cap = 64 * 1024 * 1024  # conservative default (v7x per-core VMEM)
    try:
        info = pltpu.get_tpu_info()
        cap = int(getattr(info, "vmem_capacity_bytes", cap))
    except Exception:
        pass
    return int(min(max(cap * 3 // 4, 32 * 1024 * 1024), 100 * 1024 * 1024))


def _pick_row_tile(H, W, k1p, cout_p, vmem_limit):
    """Largest divisor of H whose per-step working set fits the VMEM budget."""
    budget = vmem_limit // 3  # headroom for weights, pipeline buffers, temps
    best = 1
    for th in range(1, H + 1):
        if H % th:
            continue
        need = (th * W * 9 * cout_p * 2            # conv2 im2col concat (bf16)
                + (th + 2) * (W + 2) * cout_p * 2  # mid scratch (bf16)
                + (th + 2) * W * k1p * 2 * 2       # double-buffered patch block
                + (th + 2) * W * cout_p * 4        # conv1 f32 accum
                + th * W * cout_p * 4              # conv2 f32 accum
                + th * W * cout_p * 4 * 2)         # double-buffered f32 output
        if need <= budget:
            best = th
    return best


def _double_conv_kernel(ph_ref, w1_ref, b1_ref, w2_ref, b2_ref, o_ref, mid_ref):
    # ph_ref : ((TH+2)*W, K1p)        bf16 conv1 im2col patches (1-row halo)
    # w1_ref : (K1p, Cout_p)          bf16 conv1 weights (BN scale folded in)
    # w2_ref : (9*Cout_p, Cout_p)     bf16 conv2 im2col weights (scale folded)
    # b*_ref : (1, Cout_p)            f32 folded conv-bias + BN shift
    # o_ref  : (1, TH, W, Cout_p)     f32 output rows for this tile
    # mid_ref: (TH+2, W+2, Cout_p)    bf16 scratch, zero-padded conv1 output
    t = pl.program_id(1)
    THp2, Wp2, Cm = mid_ref.shape
    TH, W = THp2 - 2, Wp2 - 2

    # ---- conv1 (3x3, pad=1): single bf16 MXU matmul, f32 accumulate ----
    h1 = jnp.dot(ph_ref[...], w1_ref[...], preferred_element_type=jnp.float32)
    h1 = jnp.maximum(h1 + b1_ref[...], 0.0)                 # BN folded; ReLU
    h1 = h1.astype(jnp.bfloat16).reshape(THp2, W, Cm)       # cast on small tensor

    # Stage the zero-padded intermediate in bf16.  Interior is fully written,
    # the 1-px column halo is zeroed each step, and the top/bottom rows are
    # zeroed only on the first/last row tile (they are conv2's spatial padding;
    # for interior tiles they are valid recomputed conv1 halo rows).
    mid_ref[:, 1:W + 1, :] = h1
    zcol = jnp.zeros((THp2, 1, Cm), mid_ref.dtype)
    mid_ref[:, 0:1, :] = zcol
    mid_ref[:, W + 1:W + 2, :] = zcol
    zrow = jnp.zeros((1, Wp2, Cm), mid_ref.dtype)

    @pl.when(t == 0)
    def _():
        mid_ref[0:1, :, :] = zrow

    @pl.when(t == pl.num_programs(1) - 1)
    def _():
        mid_ref[TH + 1:TH + 2, :, :] = zrow

    # ---- conv2 (3x3, pad=1): in-kernel bf16 im2col + single MXU matmul ----
    mid = mid_ref[...]
    taps = [mid[dy:dy + TH, dx:dx + W, :].reshape(TH * W, Cm)
            for dy in range(3) for dx in range(3)]
    p2 = jnp.concatenate(taps, axis=-1)                      # (TH*W, 9*Cout_p)
    h2 = jnp.dot(p2, w2_ref[...], preferred_element_type=jnp.float32)
    h2 = jnp.maximum(h2 + b2_ref[...], 0.0)
    o_ref[0] = h2.reshape(TH, W, Cm)                         # lane-dense store


def inconv_forward(x_nchw, kparams, out_ch, row_tile=None):
    """x_nchw: (N, Cin, H, W) float32 -> (N, Cout, H, W) float32."""
    w1, b1 = kparams["w1"], kparams["b1"]
    w2, b2 = kparams["w2"], kparams["b2"]
    k1p, cout_p = kparams["k1p"], kparams["cout_p"]
    N, Cin, H, W = x_nchw.shape

    vmem_limit = _vmem_limit_bytes()
    TH = row_tile if row_tile is not None else _pick_row_tile(
        H, W, k1p, cout_p, vmem_limit)
    if H % TH != 0:
        raise ValueError(f"row_tile {TH} must divide H={H}")
    T = H // TH

    # NCHW -> NHWC bf16, 1-px spatial zero pad, conv1 im2col patches (XLA side:
    # Cin is tiny for inconv, so this keeps the kernel's conv1 K at 128 lanes).
    x = jnp.transpose(x_nchw, (0, 2, 3, 1)).astype(jnp.bfloat16)
    xp = jnp.pad(x, ((0, 0), (1, 1), (1, 1), (0, 0)))
    taps = [xp[:, dy:dy + H, dx:dx + W, :] for dy in range(3) for dx in range(3)]
    patches = jnp.concatenate(taps, axis=-1)                  # (N, H, W, 9*Cin)
    patches = jnp.pad(patches, ((0, 0), (0, 0), (0, 0), (0, k1p - 9 * Cin)))
    # Extended rows -1 and H are zero rows (the kernel overwrites their conv1
    # output with zeros: they are conv2's padding).  Stack per-tile slabs with a
    # 1-row recompute halo so every grid block is a plain, non-overlapping slab.
    patches = jnp.pad(patches, ((0, 0), (1, 1), (0, 0), (0, 0)))  # (N,H+2,W,k1p)
    ph = jnp.stack([patches[:, i * TH: i * TH + TH + 2] for i in range(T)],
                   axis=1)
    ph = ph.reshape(N, T, (TH + 2) * W, k1p)

    out_nhwc = pl.pallas_call(
        _double_conv_kernel,
        out_shape=jax.ShapeDtypeStruct((N, H, W, cout_p), jnp.float32),
        grid_spec=pltpu.PrefetchScalarGridSpec(
            num_scalar_prefetch=0,
            grid=(N, T),
            in_specs=[
                pl.BlockSpec((None, None, (TH + 2) * W, k1p),
                             lambda n, t: (n, t, 0, 0)),
                pl.BlockSpec((k1p, cout_p), lambda n, t: (0, 0)),
                pl.BlockSpec((1, cout_p), lambda n, t: (0, 0)),
                pl.BlockSpec((9 * cout_p, cout_p), lambda n, t: (0, 0)),
                pl.BlockSpec((1, cout_p), lambda n, t: (0, 0)),
            ],
            out_specs=pl.BlockSpec((1, TH, W, cout_p), lambda n, t: (n, t, 0, 0)),
            scratch_shapes=[pltpu.VMEM((TH + 2, W + 2, cout_p), jnp.bfloat16)],
        ),
        compiler_params=pltpu.CompilerParams(
            dimension_semantics=("parallel", "parallel"),
            vmem_limit_bytes=vmem_limit),
    )(ph, w1, b1, w2, b2)

    # drop the padded channels, back to NCHW
    return jnp.transpose(out_nhwc[..., :out_ch], (0, 3, 1, 2))


def init_params(key, in_ch, out_ch, eps=1e-5):
    """Deterministic synthetic params matching the PyTorch module shapes.

    Returns (kernel_params, reference_params).  Kernel params are lane-padded,
    im2col-reshaped bf16 weights with the eval-mode BN scale folded in, plus
    f32 folded biases; reference params are the unpadded f32 originals.
    """
    ks = jax.random.split(key, 8)
    # Conv2d weights in PyTorch OIHW layout.
    w1_oihw = 0.1 * jax.random.normal(ks[0], (out_ch, in_ch, 3, 3), jnp.float32)
    cb1 = 0.1 * jax.random.normal(ks[1], (out_ch,), jnp.float32)
    w2_oihw = 0.1 * jax.random.normal(ks[2], (out_ch, out_ch, 3, 3), jnp.float32)
    cb2 = 0.1 * jax.random.normal(ks[3], (out_ch,), jnp.float32)
    # BatchNorm2d params / running stats (eval mode).
    g1 = 1.0 + 0.1 * jax.random.normal(ks[4], (out_ch,), jnp.float32)
    beta1 = 0.1 * jax.random.normal(ks[5], (out_ch,), jnp.float32)
    g2 = 1.0 + 0.1 * jax.random.normal(ks[6], (out_ch,), jnp.float32)
    beta2 = 0.1 * jax.random.normal(ks[7], (out_ch,), jnp.float32)
    rm1, rv1 = jnp.zeros((out_ch,)), jnp.ones((out_ch,))
    rm2, rv2 = jnp.zeros((out_ch,)), jnp.ones((out_ch,))

    s1 = g1 / jnp.sqrt(rv1 + eps)
    b1 = (cb1 - rm1) * s1 + beta1            # conv bias folded with BN shift
    s2 = g2 / jnp.sqrt(rv2 + eps)
    b2 = (cb2 - rm2) * s2 + beta2

    w1_hwio = jnp.transpose(w1_oihw, (2, 3, 1, 0))   # (3,3,Cin,Cout)
    w2_hwio = jnp.transpose(w2_oihw, (2, 3, 1, 0))   # (3,3,Cout,Cout)
    ref_params = (w1_hwio, s1, b1, w2_hwio, s2, b2)

    k1p = _round_up(9 * in_ch, LANE)
    cout_p = _round_up(out_ch, LANE)

    # conv1: wrapper-side im2col runs over REAL Cin, so fold scale, reshape to
    # (9*Cin, Cout) and pad K only at the tail.
    w1f = (w1_hwio * s1).reshape(9 * in_ch, out_ch)
    w1_k = jnp.pad(w1f, ((0, k1p - 9 * in_ch),
                         (0, cout_p - out_ch))).astype(jnp.bfloat16)

    # conv2: in-kernel im2col runs over LANE-PADDED mid channels, so pad the
    # input-channel axis BEFORE the (dy,dx,c) reshape to keep ordering aligned.
    w2f = w2_hwio * s2
    w2f = jnp.pad(w2f, ((0, 0), (0, 0),
                        (0, cout_p - out_ch), (0, cout_p - out_ch)))
    w2_k = w2f.reshape(9 * cout_p, cout_p).astype(jnp.bfloat16)

    def pad_b(v):
        return jnp.pad(v, (0, cout_p - v.shape[0])).reshape(1, cout_p).astype(
            jnp.float32)

    kernel_params = dict(w1=w1_k, b1=pad_b(b1), w2=w2_k, b2=pad_b(b2),
                         k1p=k1p, cout_p=cout_p)
    return kernel_params, ref_params


def reference_forward(x_nchw, ref_params):
    """Pure-JAX reference (same math, full f32 precision)."""
    w1, s1, b1, w2, s2, b2 = ref_params
    x = jnp.transpose(x_nchw, (0, 2, 3, 1)).astype(jnp.float32)

    def conv3x3(h, w):
        N, H, W, _ = h.shape
        hp = jnp.pad(h, ((0, 0), (1, 1), (1, 1), (0, 0)))
        out = jnp.zeros((N, H, W, w.shape[-1]), jnp.float32)
        for dy in range(3):
            for dx in range(3):
                out = out + jnp.einsum(
                    'nhwc,cd->nhwd', hp[:, dy:dy + H, dx:dx + W, :], w[dy, dx],
                    precision=jax.lax.Precision.HIGHEST)
        return out

    h1 = jnp.maximum(conv3x3(x, w1) * s1 + b1, 0.0)
    h2 = jnp.maximum(conv3x3(h1, w2) * s2 + b2, 0.0)
    return jnp.transpose(h2, (0, 3, 1, 2))


if __name__ == "__main__":
    N, Cin, Cout, H, W = 2, 4, 8, 16, 16
    key = jax.random.PRNGKey(0)
    kx, kp = jax.random.split(key)

    x = jax.random.normal(kx, (N, Cin, H, W), jnp.float32)
    kparams, rparams = init_params(kp, Cin, Cout)

    # row_tile=8 exercises the multi-tile (halo recompute) path at this size;
    # by default the tile is auto-sized from the VMEM budget.
    out = inconv_forward(x, kparams, Cout, row_tile=8)
    out = jax.block_until_ready(out)
    assert out.shape == (N, Cout, H, W), out.shape

    ref = reference_forward(x, rparams)
    # bf16 MXU feed (inputs, weights, intermediate): compare with a combined
    # absolute / relative tolerance.
    err = float(jnp.max(jnp.abs(out - ref) / (1.0 + jnp.abs(ref))))
    if err > 5e-2:
        raise AssertionError(f"kernel/reference mismatch: max scaled err {err}")
    print("KERNEL_OK")
</pallas_src>

<mosaic_0001>
module attributes {stable_mosaic.version = 11 : i64} {
  func.func @_double_conv_kernel(%arg0: i32, %arg1: i32, %arg2: memref<1x1x160x128xbf16, #tpu.memory_space<vmem>>, %arg3: memref<128x128xbf16, #tpu.memory_space<vmem>>, %arg4: memref<1x128xf32, #tpu.memory_space<vmem>>, %arg5: memref<1152x128xbf16, #tpu.memory_space<vmem>>, %arg6: memref<1x128xf32, #tpu.memory_space<vmem>>, %arg7: memref<1x8x16x128xf32, #tpu.memory_space<vmem>>, %arg8: memref<10x18x128xbf16, #tpu.memory_space<vmem>>) attributes {dimension_semantics = [#tpu.dimension_semantics<parallel>, #tpu.dimension_semantics<parallel>], iteration_bounds = array<i64: 2, 2>, scalar_prefetch = 0 : i64, scratch_operands = 1 : i64, tpu.core_type = #tpu.core_type<tc>, window_params = [{transform_indices = @transform_0, window_bounds = array<i64: 1, 1, 160, 128>}, {pipeline_mode = #tpu.pipeline_mode<synchronous>, transform_indices = @transform_1, window_bounds = array<i64: 128, 128>}, {pipeline_mode = #tpu.pipeline_mode<synchronous>, transform_indices = @transform_2, window_bounds = array<i64: 1, 128>}, {pipeline_mode = #tpu.pipeline_mode<synchronous>, transform_indices = @transform_3, window_bounds = array<i64: 1152, 128>}, {pipeline_mode = #tpu.pipeline_mode<synchronous>, transform_indices = @transform_4, window_bounds = array<i64: 1, 128>}, {transform_indices = @transform_5, window_bounds = array<i64: 1, 8, 16, 128>}]} {
    %c0 = arith.constant 0 : index
    %c0_0 = arith.constant 0 : index
    %c0_1 = arith.constant 0 : index
    %c0_2 = arith.constant 0 : index
    %0 = vector.load %arg2[%c0, %c0_0, %c0_1, %c0_2] : memref<1x1x160x128xbf16, #tpu.memory_space<vmem>>, vector<1x1x160x128xbf16>
    %1 = vector.shape_cast %0 : vector<1x1x160x128xbf16> to vector<160x128xbf16>
    %c0_3 = arith.constant 0 : index
    %c0_4 = arith.constant 0 : index
    %2 = vector.load %arg3[%c0_3, %c0_4] : memref<128x128xbf16, #tpu.memory_space<vmem>>, vector<128x128xbf16>
    %cst = arith.constant dense<0.000000e+00> : vector<160x128xf32>
    %3 = tpu.matmul %1, %2, %cst {dimension_numbers = #tpu.dot_dimension_numbers<[1], [0], [0], [1], [0, 0, 1, 1], [], []>} : vector<160x128xbf16>, vector<128x128xbf16>, vector<160x128xf32> -> vector<160x128xf32>
    %c0_5 = arith.constant 0 : index
    %c0_6 = arith.constant 0 : index
    %4 = vector.load %arg4[%c0_5, %c0_6] : memref<1x128xf32, #tpu.memory_space<vmem>>, vector<1x128xf32>
    %5 = vector.broadcast %4 : vector<1x128xf32> to vector<160x128xf32>
    %6 = arith.addf %3, %5 : vector<160x128xf32>
    %cst_7 = arith.constant 0.000000e+00 : f32
    %7 = vector.broadcast %cst_7 : f32 to vector<160x128xf32>
    %8 = arith.maximumf %6, %7 : vector<160x128xf32>
    %9 = arith.truncf %8 : vector<160x128xf32> to vector<160x128xbf16>
    %10 = vector.shape_cast %9 : vector<160x128xbf16> to vector<10x16x128xbf16>
    %c0_8 = arith.constant 0 : index
    %c1 = arith.constant 1 : index
    %c0_9 = arith.constant 0 : index
    %11 = vector.load %arg8[%c0_8, %c1, %c0_9] : memref<10x18x128xbf16, #tpu.memory_space<vmem>>, vector<10x16x128xbf16>
    tpu.vector_store %arg8[%c0_8, %c1, %c0_9], %10 {strides = array<i32>} : memref<10x18x128xbf16, #tpu.memory_space<vmem>>, vector<10x16x128xbf16>,
    %cst_10 = arith.constant 0.000000e+00 : bf16
    %12 = vector.broadcast %cst_10 : bf16 to vector<10x1x128xbf16>
    %c0_11 = arith.constant 0 : index
    %c0_12 = arith.constant 0 : index
    %c0_13 = arith.constant 0 : index
    %13 = vector.load %arg8[%c0_11, %c0_12, %c0_13] : memref<10x18x128xbf16, #tpu.memory_space<vmem>>, vector<10x1x128xbf16>
    tpu.vector_store %arg8[%c0_11, %c0_12, %c0_13], %12 {strides = array<i32>} : memref<10x18x128xbf16, #tpu.memory_space<vmem>>, vector<10x1x128xbf16>,
    %c0_14 = arith.constant 0 : index
    %c17 = arith.constant 17 : index
    %c0_15 = arith.constant 0 : index
    %14 = vector.load %arg8[%c0_14, %c17, %c0_15] : memref<10x18x128xbf16, #tpu.memory_space<vmem>>, vector<10x1x128xbf16>
    tpu.vector_store %arg8[%c0_14, %c17, %c0_15], %12 {strides = array<i32>} : memref<10x18x128xbf16, #tpu.memory_space<vmem>>, vector<10x1x128xbf16>,
    %cst_16 = arith.constant 0.000000e+00 : bf16
    %15 = vector.broadcast %cst_16 : bf16 to vector<1x18x128xbf16>
    %c0_i32 = arith.constant 0 : i32
    %16 = arith.cmpi eq, %arg1, %c0_i32 : i32
    %17 = arith.extui %16 : i1 to i32
    %c0_i32_17 = arith.constant 0 : i32
    %18 = arith.cmpi ne, %17, %c0_i32_17 : i32
    scf.if %18 {
      %c0_32 = arith.constant 0 : index
      %c0_33 = arith.constant 0 : index
      %c0_34 = arith.constant 0 : index
      %53 = vector.load %arg8[%c0_32, %c0_33, %c0_34] : memref<10x18x128xbf16, #tpu.memory_space<vmem>>, vector<1x18x128xbf16>
      tpu.vector_store %arg8[%c0_32, %c0_33, %c0_34], %15 {strides = array<i32>} : memref<10x18x128xbf16, #tpu.memory_space<vmem>>, vector<1x18x128xbf16>,
    } else {
    }
    %c1_i32 = arith.constant 1 : i32
    %19 = arith.cmpi eq, %arg1, %c1_i32 : i32
    %20 = arith.extui %19 : i1 to i32
    %c0_i32_18 = arith.constant 0 : i32
    %21 = arith.cmpi ne, %20, %c0_i32_18 : i32
    scf.if %21 {
      %c9 = arith.constant 9 : index
      %c0_32 = arith.constant 0 : index
      %c0_33 = arith.constant 0 : index
      %53 = vector.load %arg8[%c9, %c0_32, %c0_33] : memref<10x18x128xbf16, #tpu.memory_space<vmem>>, vector<1x18x128xbf16>
      tpu.vector_store %arg8[%c9, %c0_32, %c0_33], %15 {strides = array<i32>} : memref<10x18x128xbf16, #tpu.memory_space<vmem>>, vector<1x18x128xbf16>,
    } else {
    }
    %c0_19 = arith.constant 0 : index
    %c0_20 = arith.constant 0 : index
    %c0_21 = arith.constant 0 : index
    %22 = vector.load %arg8[%c0_19, %c0_20, %c0_21] : memref<10x18x128xbf16, #tpu.memory_space<vmem>>, vector<10x18x128xbf16>
    %23 = vector.extract_strided_slice %22 {offsets = [0, 0, 0], sizes = [8, 16, 128], strides = [1, 1, 1]} : vector<10x18x128xbf16> to vector<8x16x128xbf16>
    %24 = vector.shape_cast %23 : vector<8x16x128xbf16> to vector<128x128xbf16>
    %25 = vector.extract_strided_slice %22 {offsets = [0, 1, 0], sizes = [8, 16, 128], strides = [1, 1, 1]} : vector<10x18x128xbf16> to vector<8x16x128xbf16>
    %26 = vector.shape_cast %25 : vector<8x16x128xbf16> to vector<128x128xbf16>
    %27 = vector.extract_strided_slice %22 {offsets = [0, 2, 0], sizes = [8, 16, 128], strides = [1, 1, 1]} : vector<10x18x128xbf16> to vector<8x16x128xbf16>
    %28 = vector.shape_cast %27 : vector<8x16x128xbf16> to vector<128x128xbf16>
    %29 = vector.extract_strided_slice %22 {offsets = [1, 0, 0], sizes = [8, 16, 128], strides = [1, 1, 1]} : vector<10x18x128xbf16> to vector<8x16x128xbf16>
    %30 = vector.shape_cast %29 : vector<8x16x128xbf16> to vector<128x128xbf16>
    %31 = vector.extract_strided_slice %22 {offsets = [1, 1, 0], sizes = [8, 16, 128], strides = [1, 1, 1]} : vector<10x18x128xbf16> to vector<8x16x128xbf16>
    %32 = vector.shape_cast %31 : vector<8x16x128xbf16> to vector<128x128xbf16>
    %33 = vector.extract_strided_slice %22 {offsets = [1, 2, 0], sizes = [8, 16, 128], strides = [1, 1, 1]} : vector<10x18x128xbf16> to vector<8x16x128xbf16>
    %34 = vector.shape_cast %33 : vector<8x16x128xbf16> to vector<128x128xbf16>
    %35 = vector.extract_strided_slice %22 {offsets = [2, 0, 0], sizes = [8, 16, 128], strides = [1, 1, 1]} : vector<10x18x128xbf16> to vector<8x16x128xbf16>
    %36 = vector.shape_cast %35 : vector<8x16x128xbf16> to vector<128x128xbf16>
    %37 = vector.extract_strided_slice %22 {offsets = [2, 1, 0], sizes = [8, 16, 128], strides = [1, 1, 1]} : vector<10x18x128xbf16> to vector<8x16x128xbf16>
    %38 = vector.shape_cast %37 : vector<8x16x128xbf16> to vector<128x128xbf16>
    %39 = vector.extract_strided_slice %22 {offsets = [2, 2, 0], sizes = [8, 16, 128], strides = [1, 1, 1]} : vector<10x18x128xbf16> to vector<8x16x128xbf16>
    %40 = vector.shape_cast %39 : vector<8x16x128xbf16> to vector<128x128xbf16>
    %41 = tpu.concatenate %24, %26, %28, %30, %32, %34, %36, %38, %40 in 1 : vector<128x128xbf16>, vector<128x128xbf16>, vector<128x128xbf16>, vector<128x128xbf16>, vector<128x128xbf16>, vector<128x128xbf16>, vector<128x128xbf16>, vector<128x128xbf16>, vector<128x128xbf16> -> vector<128x1152xbf16>
    %c0_22 = arith.constant 0 : index
    %c0_23 = arith.constant 0 : index
    %42 = vector.load %arg5[%c0_22, %c0_23] : memref<1152x128xbf16, #tpu.memory_space<vmem>>, vector<1152x128xbf16>
    %cst_24 = arith.constant dense<0.000000e+00> : vector<128x128xf32>
    %43 = tpu.matmul %41, %42, %cst_24 {dimension_numbers = #tpu.dot_dimension_numbers<[1], [0], [0], [1], [0, 0, 1, 1], [], []>} : vector<128x1152xbf16>, vector<1152x128xbf16>, vector<128x128xf32> -> vector<128x128xf32>
    %c0_25 = arith.constant 0 : index
    %c0_26 = arith.constant 0 : index
    %44 = vector.load %arg6[%c0_25, %c0_26] : memref<1x128xf32, #tpu.memory_space<vmem>>, vector<1x128xf32>
    %45 = vector.broadcast %44 : vector<1x128xf32> to vector<128x128xf32>
    %46 = arith.addf %43, %45 : vector<128x128xf32>
    %cst_27 = arith.constant 0.000000e+00 : f32
    %47 = vector.broadcast %cst_27 : f32 to vector<128x128xf32>
    %48 = arith.maximumf %46, %47 : vector<128x128xf32>
    %49 = vector.shape_cast %48 : vector<128x128xf32> to vector<8x16x128xf32>
    %c0_28 = arith.constant 0 : index
    %c0_29 = arith.constant 0 : index
    %c0_30 = arith.constant 0 : index
    %c0_31 = arith.constant 0 : index
    %50 = vector.load %arg7[%c0_28, %c0_29, %c0_30, %c0_31] : memref<1x8x16x128xf32, #tpu.memory_space<vmem>>, vector<1x8x16x128xf32>
    %51 = vector.shape_cast %50 : vector<1x8x16x128xf32> to vector<8x16x128xf32>
    %52 = vector.shape_cast %49 : vector<8x16x128xf32> to vector<1x8x16x128xf32>
    tpu.vector_store %arg7[%c0_28, %c0_29, %c0_30, %c0_31], %52 {strides = array<i32>} : memref<1x8x16x128xf32, #tpu.memory_space<vmem>>, vector<1x8x16x128xf32>,
    return
  }
  func.func @transform_0(%arg0: i32, %arg1: i32) -> (i32, i32, i32, i32) {
    %c0_i32 = arith.constant 0 : i32
    %c0_i32_0 = arith.constant 0 : i32
    %c0_i32_1 = arith.constant 0 : i32
    return %arg0, %arg1, %c0_i32, %c0_i32_0 : i32, i32, i32, i32
  }
  func.func @transform_1(%arg0: i32, %arg1: i32) -> (i32, i32) {
    %c0_i32 = arith.constant 0 : i32
    %c0_i32_0 = arith.constant 0 : i32
    %c0_i32_1 = arith.constant 0 : i32
    return %c0_i32, %c0_i32_0 : i32, i32
  }
  func.func @transform_2(%arg0: i32, %arg1: i32) -> (i32, i32) {
    %c0_i32 = arith.constant 0 : i32
    %c0_i32_0 = arith.constant 0 : i32
    %c0_i32_1 = arith.constant 0 : i32
    return %c0_i32, %c0_i32_0 : i32, i32
  }
  func.func @transform_3(%arg0: i32, %arg1: i32) -> (i32, i32) {
    %c0_i32 = arith.constant 0 : i32
    %c0_i32_0 = arith.constant 0 : i32
    %c0_i32_1 = arith.constant 0 : i32
    return %c0_i32, %c0_i32_0 : i32, i32
  }
  func.func @transform_4(%arg0: i32, %arg1: i32) -> (i32, i32) {
    %c0_i32 = arith.constant 0 : i32
    %c0_i32_0 = arith.constant 0 : i32
    %c0_i32_1 = arith.constant 0 : i32
    return %c0_i32, %c0_i32_0 : i32, i32
  }
  func.func @transform_5(%arg0: i32, %arg1: i32) -> (i32, i32, i32, i32) {
    %c0_i32 = arith.constant 0 : i32
    %c0_i32_0 = arith.constant 0 : i32
    %c0_i32_1 = arith.constant 0 : i32
    return %arg0, %arg1, %c0_i32, %c0_i32_0 : i32, i32, i32, i32
  }
}

</mosaic_0001>

<llo_original>
// kernel: tpu_custom_call.1
$region0: #{tpu_custom_call.1}
  #allocation0 [shape = 'u32[]', space=smem, size = 0x4, offset = 0x4, fixed_abs, tag = 'smem constant byte address 0x4 - core index']
  #allocation1 [shape = 'u32[72,128]{1,0:T(1,128)}', space=vmem, size = 0x9000, scoped, tag = 'internal scratch']
  #allocation2 [shape = 'bf16[10,18,128]{2,1,0:T(8,128)(2,1)}', space=vmem, size = 0xf000, scoped, tag = 'scratch operand']
  %s0 = inlined_call_operand.hbm [shape: bf16[2,2,160,128], index: 0, kind: input, shape index: {}]
  %s1 = inlined_call_operand.hbm [shape: bf16[128,128], index: 1, kind: input, shape index: {}]
  %s2 = inlined_call_operand.vmem [shape: f32[1,128], index: 2, kind: input, shape index: {}]
  %s3 = inlined_call_operand.hbm [shape: bf16[1152,128], index: 3, kind: input, shape index: {}]
  %s4 = inlined_call_operand.vmem [shape: f32[1,128], index: 4, kind: input, shape index: {}]
  %s5 = inlined_call_operand.hbm [shape: f32[2,16,16,128], index: 5, kind: output, shape index: {}]
  %s6 = sld [smem:[#allocation0]]
  $region73: #{tpu_custom_call.1} parent=0
    _
  %s8 = ssub.s32 1, %s6
  %s9 = scalar_select 0, %s8, %s6
  $region1: #{tpu_custom_call.1} parent=0
    #allocation3 [shape = 'u8[81920]{0}', space=vmem, size = 0x14000, scoped, tag = 'input window, operand 0']
    #allocation4 [shape = 's32[2]{0}', space=sflag, size = 0x8, scoped, tag = 'scoped memory for tpu_custom_call.1']
    #allocation5 [shape = 's32[2]{0}', space=sflag, size = 0x8, scoped, tag = 'scoped memory for tpu_custom_call.1']
    #allocation6 [shape = 'u8[32768]{0}', space=vmem, size = 0x8000, scoped, tag = 'input window, operand 1, single buffered']
    #allocation7 [shape = 's32[1]{0}', space=sflag, size = 0x4, scoped, tag = 'scoped memory for tpu_custom_call.1']
    #allocation8 [shape = 'u8[294912]{0}', space=vmem, size = 0x48000, scoped, tag = 'input window, operand 3, single buffered']
    #allocation9 [shape = 'u8[131072]{0}', space=vmem, size = 0x20000, scoped, tag = 'output window, operand 0']
    %10 = vsyncpa [#allocation4], 0
    %s11 = scalar_lea.sflag [#allocation4], 1
    %12 = vsyncpa %s11, 0
    %13 = vsyncpa [#allocation7], 0
    %14 = vsyncpa [#allocation5], 0
    %s15 = scalar_lea.sflag [#allocation5], 1
    %16 = vsyncpa %s15, 0
    loop: start=0, step=1, limit=6
    $region2: #{tpu_custom_call.1} parent=1 // loop_pre_header
      _
    $region3: #{tpu_custom_call.1} parent=1 // loop_header
      %s18 = sphi 0, %s22
      %p19 = scmp.ge.s32.totalorder %s18, 6
      %s25 = sphi 0, %s37
      %s26 = sphi 0, %s33
      %s27 = sphi 0, %s25
      %s28 = sphi 0, %s26
      %s29 = sphi 0, %s27
      %s30 = sphi 0, %s28
      %s42 = sphi 0, %s44
      %s45 = sphi 0, %s42
      %s46 = sphi 0, %s45
      %s62 = sphi 0, %s46
      %s66 = sphi 0, %s66
      %s68 = sphi 0, %s66
      %s69 = sphi 0, %s68
      %s83 = sphi 0, %s69
      %s87 = sphi 0, %s87
      %s89 = sphi 0, %s87
      %s90 = sphi 0, %s89
      %s104 = sphi 0, %s90
      %s108 = sphi 0, %s108
      %s110 = sphi 0, %s108
      %s111 = sphi 0, %s110
      %s125 = sphi 0, %s111
      %s129 = sphi 0, %s129
      %s131 = sphi 0, %s129
      %s132 = sphi 0, %s131
      %s146 = sphi 0, %s132
      %s154 = sphi 0, %s156
      %s157 = sphi 0, %s154
      %s158 = sphi 0, %s157
      %s174 = sphi 0, %s158
    $region4: #{tpu_custom_call.1} parent=1 // loop_header_branch
      %21 = sbr.rel (%p19) target = $region8
    $region5: #{tpu_custom_call.1} parent=1 // loop_body
      %s23 = ssub.s32 %s18, 1
      %s24 = ssub.s32 %s18, 2
      %s31 = sadd.s32 1, %s26
      %p32 = scmp.ge.s32.totalorder %s31, 2
      %s33 = scalar_select %p32, 0, %s31
      %s34 = sadd.s32 1, %s25
      %s35 = scalar_select %p32, %s34, %s25
      %p36 = scmp.ge.s32.totalorder %s35, 2
      %s37 = scalar_select %p36, 0, %s35
      %s38 = ssub.s32 %s25, %s37
      %s39 = ssub.s32 %s26, %s33
      %s40 = sor.u32 %s38, %s39
      %p41 = scmp.eq.s32.totalorder %s40, 0
      %s43 = sadd.s32 %s42, 1
      %s44 = scalar_select %p41, %s42, %s43
      %p47 = pneg %p41
      %p48 = scmp.eq.s32.totalorder %s18, 3
      %p49 = por %p47, %p48
      %p50 = scmp.ne.s32.totalorder %s42, %s45
      %p51 = scmp.eq.s32.totalorder %s18, 0
      %p52 = por %p50, %p51
      %p53 = scmp.ne.s32.totalorder %s42, %s45
      %p54 = scmp.eq.s32.totalorder %s23, 3
      %p55 = por %p53, %p54
      %p56 = scmp.ne.s32.totalorder %s45, %s46
      %p57 = scmp.eq.s32.totalorder %s23, 0
      %p58 = por %p56, %p57
      %p59 = scmp.ne.s32.totalorder %s45, %s46
      %p60 = scmp.eq.s32.totalorder %s24, 3
      %p61 = por %p59, %p60
      %p63 = scmp.ne.s32.totalorder %s46, %s62
      %p64 = scmp.eq.s32.totalorder %s24, 0
      %p65 = por %p63, %p64
      %s67 = sadd.s32 %s66, 1
      %p70 = scmp.eq.s32.totalorder %s18, 3
      %p71 = scmp.ne.s32.totalorder %s66, %s68
      %p72 = scmp.eq.s32.totalorder %s18, 0
      %p73 = por %p71, %p72
      %p74 = scmp.ne.s32.totalorder %s66, %s68
      %p75 = scmp.eq.s32.totalorder %s23, 3
      %p76 = por %p74, %p75
      %p77 = scmp.ne.s32.totalorder %s68, %s69
      %p78 = scmp.eq.s32.totalorder %s23, 0
      %p79 = por %p77, %p78
      %p80 = scmp.ne.s32.totalorder %s68, %s69
      %p81 = scmp.eq.s32.totalorder %s24, 3
      %p82 = por %p80, %p81
      %p84 = scmp.ne.s32.totalorder %s69, %s83
      %p85 = scmp.eq.s32.totalorder %s24, 0
      %p86 = por %p84, %p85
      %s88 = sadd.s32 %s87, 1
      %p91 = scmp.eq.s32.totalorder %s18, 3
      %p92 = scmp.ne.s32.totalorder %s87, %s89
      %p93 = scmp.eq.s32.totalorder %s18, 0
      %p94 = por %p92, %p93
      %p95 = scmp.ne.s32.totalorder %s87, %s89
      %p96 = scmp.eq.s32.totalorder %s23, 3
      %p97 = por %p95, %p96
      %p98 = scmp.ne.s32.totalorder %s89, %s90
      %p99 = scmp.eq.s32.totalorder %s23, 0
      %p100 = por %p98, %p99
      %p101 = scmp.ne.s32.totalorder %s89, %s90
      %p102 = scmp.eq.s32.totalorder %s24, 3
      %p103 = por %p101, %p102
      %p105 = scmp.ne.s32.totalorder %s90, %s104
      %p106 = scmp.eq.s32.totalorder %s24, 0
      %p107 = por %p105, %p106
      %s109 = sadd.s32 %s108, 1
      %p112 = scmp.eq.s32.totalorder %s18, 3
      %p113 = scmp.ne.s32.totalorder %s108, %s110
      %p114 = scmp.eq.s32.totalorder %s18, 0
      %p115 = por %p113, %p114
      %p116 = scmp.ne.s32.totalorder %s108, %s110
      %p117 = scmp.eq.s32.totalorder %s23, 3
      %p118 = por %p116, %p117
      %p119 = scmp.ne.s32.totalorder %s110, %s111
      %p120 = scmp.eq.s32.totalorder %s23, 0
      %p121 = por %p119, %p120
      %p122 = scmp.ne.s32.totalorder %s110, %s111
      %p123 = scmp.eq.s32.totalorder %s24, 3
      %p124 = por %p122, %p123
      %p126 = scmp.ne.s32.totalorder %s111, %s125
      %p127 = scmp.eq.s32.totalorder %s24, 0
      %p128 = por %p126, %p127
      %s130 = sadd.s32 %s129, 1
      %p133 = scmp.eq.s32.totalorder %s18, 3
      %p134 = scmp.ne.s32.totalorder %s129, %s131
      %p135 = scmp.eq.s32.totalorder %s18, 0
      %p136 = por %p134, %p135
      %p137 = scmp.ne.s32.totalorder %s129, %s131
      %p138 = scmp.eq.s32.totalorder %s23, 3
      %p139 = por %p137, %p138
      %p140 = scmp.ne.s32.totalorder %s131, %s132
      %p141 = scmp.eq.s32.totalorder %s23, 0
      %p142 = por %p140, %p141
      %p143 = scmp.ne.s32.totalorder %s131, %s132
      %p144 = scmp.eq.s32.totalorder %s24, 3
      %p145 = por %p143, %p144
      %p147 = scmp.ne.s32.totalorder %s132, %s146
      %p148 = scmp.eq.s32.totalorder %s24, 0
      %p149 = por %p147, %p148
      %s150 = ssub.s32 %s25, %s37
      %s151 = ssub.s32 %s26, %s33
      %s152 = sor.u32 %s150, %s151
      %p153 = scmp.eq.s32.totalorder %s152, 0
      %s155 = sadd.s32 %s154, 1
      %s156 = scalar_select %p153, %s154, %s155
      %p159 = pneg %p153
      %p160 = scmp.eq.s32.totalorder %s18, 3
      %p161 = por %p159, %p160
      %p162 = scmp.ne.s32.totalorder %s154, %s157
      %p163 = scmp.eq.s32.totalorder %s18, 0
      %p164 = por %p162, %p163
      %p165 = scmp.ne.s32.totalorder %s154, %s157
      %p166 = scmp.eq.s32.totalorder %s23, 3
      %p167 = por %p165, %p166
      %p168 = scmp.ne.s32.totalorder %s157, %s158
      %p169 = scmp.eq.s32.totalorder %s23, 0
      %p170 = por %p168, %p169
      %p171 = scmp.ne.s32.totalorder %s157, %s158
      %p172 = scmp.eq.s32.totalorder %s24, 3
      %p173 = por %p171, %p172
      %p175 = scmp.ne.s32.totalorder %s158, %s174
      %p176 = scmp.eq.s32.totalorder %s24, 0
      %p177 = por %p175, %p176
      %p178 = scmp.le.s32.totalorder 1, %s18
      %p179 = scmp.lt.s32.totalorder %s18, 5
      %p180 = pnand %p178, %p179
      %p181 = pneg %p180
      // Predicated region
      $region9: #{tpu_custom_call.1} parent=5 // pred_check
        _
      $region10: #{tpu_custom_call.1} parent=5 // pred_check_branch
        %183 = sbr.rel (%p180) target = $region12
      $region11: #{tpu_custom_call.1} parent=5 // pred_region
        %s184 = ssub.s32 %s18, 1
        // Predicated region
        $region13: #{tpu_custom_call.1} parent=11 // pred_check
          %p185 = pneg %p79
        $region14: #{tpu_custom_call.1} parent=11 // pred_check_branch
          %187 = sbr.rel (%p185) target = $region16
        $region15: #{tpu_custom_call.1} parent=11 // pred_region
          %189 = vsyncadd [#allocation7], 0
          %s190 = sshll.u32 %s1, 4
          %s191 = int_to_ptr.hbm [resolvable:$true] %s190
          %s192 = sshll.u32 [#allocation6], 4
          %s193 = int_to_ptr.vmem [resolvable:$true] %s192
          %198 = dma.hbm_to_vmem [thread:$0]  %s191, 1024, %s193, [#allocation7], 64, 64, 4
        $region16: #{tpu_custom_call.1} parent=11 // pred_fallthru
          _
        // Predicated region
        $region17: #{tpu_custom_call.1} parent=11 // pred_check
          %p199 = pneg %p100
        $region18: #{tpu_custom_call.1} parent=11 // pred_check_branch
          %201 = sbr.rel (%p199) target = $region20
        $region19: #{tpu_custom_call.1} parent=11 // pred_region
          _
        $region20: #{tpu_custom_call.1} parent=11 // pred_fallthru
          _
        // Predicated region
        $region21: #{tpu_custom_call.1} parent=11 // pred_check
          %p202 = pneg %p121
        $region22: #{tpu_custom_call.1} parent=11 // pred_check_branch
          %204 = sbr.rel (%p202) target = $region24
        $region23: #{tpu_custom_call.1} parent=11 // pred_region
          %206 = vsyncadd [#allocation7], 0
          %s207 = sshll.u32 %s3, 4
          %s208 = int_to_ptr.hbm [resolvable:$true] %s207
          %s209 = sshll.u32 [#allocation8], 4
          %s210 = int_to_ptr.vmem [resolvable:$true] %s209
          %215 = dma.hbm_to_vmem [thread:$0]  %s208, 9216, %s210, [#allocation7], 64, 64, 4
        $region24: #{tpu_custom_call.1} parent=11 // pred_fallthru
          _
        // Predicated region
        $region25: #{tpu_custom_call.1} parent=11 // pred_check
          %p216 = pneg %p142
        $region26: #{tpu_custom_call.1} parent=11 // pred_check_branch
          %218 = sbr.rel (%p216) target = $region28
        $region27: #{tpu_custom_call.1} parent=11 // pred_region
          _
        $region28: #{tpu_custom_call.1} parent=11 // pred_fallthru
          _
      $region12: #{tpu_custom_call.1} parent=5 // pred_fallthru
        _
      %p219 = scmp.lt.s32.totalorder %s18, 4
      // Predicated region
      $region29: #{tpu_custom_call.1} parent=5 // pred_check
        %p220 = pneg %p219
      $region30: #{tpu_custom_call.1} parent=5 // pred_check_branch
        %222 = sbr.rel (%p220) target = $region32
      $region31: #{tpu_custom_call.1} parent=5 // pred_region
        // Predicated region
        $region33: #{tpu_custom_call.1} parent=31 // pred_check
          %p223 = pneg %p52
        $region34: #{tpu_custom_call.1} parent=31 // pred_check_branch
          %225 = sbr.rel (%p223) target = $region36
        $region35: #{tpu_custom_call.1} parent=31 // pred_region
          %s226 = sand.u32 %s42, 1
          %s227 = scalar_lea.sflag [#allocation4], %s226
          %s228 = sand.u32 %s42, 1
          %s229 = smul.addr %s228, 80
          %s230 = scalar_lea.vmem [#allocation3], %s229
          %232 = vsyncadd %s227, 0
          %s233 = smul.addr %s26, 20
          %s234 = smul.addr %s25, 40
          %s235 = sadd.s32 %s233, %s234
          %s236 = smul.addr %s235, 4
          %s237 = scalar_lea.hbm %s0, %s236
          %s238 = sshll.u32 %s237, 4
          %s239 = int_to_ptr.hbm [resolvable:$true] %s238
          %s240 = sshll.u32 %s230, 4
          %s241 = int_to_ptr.vmem [resolvable:$true] %s240
          %246 = dma.hbm_to_vmem [thread:$0]  %s239, 1280, %s241, %s227, 64, 64, 4
        $region36: #{tpu_custom_call.1} parent=31 // pred_fallthru
          _
      $region32: #{tpu_custom_call.1} parent=5 // pred_fallthru
        _
      %p247 = scmp.le.s32.totalorder 1, %s18
      %p248 = scmp.lt.s32.totalorder %s18, 5
      %p249 = pnand %p247, %p248
      %p250 = pneg %p249
      // Predicated region
      $region37: #{tpu_custom_call.1} parent=5 // pred_check
        _
      $region38: #{tpu_custom_call.1} parent=5 // pred_check_branch
        %252 = sbr.rel (%p249) target = $region40
      $region39: #{tpu_custom_call.1} parent=5 // pred_region
        %s253 = ssub.s32 %s18, 1
        %s254 = sand.u32 %s45, 1
        %s255 = scalar_lea.sflag [#allocation4], %s254
        %s256 = sand.u32 %s45, 1
        %s257 = smul.addr %s256, 80
        %s258 = scalar_lea.vmem [#allocation3], %s257
        // Predicated region
        $region41: #{tpu_custom_call.1} parent=39 // pred_check
          %p259 = pneg %p58
        $region42: #{tpu_custom_call.1} parent=39 // pred_check_branch
          %261 = sbr.rel (%p259) target = $region44
        $region43: #{tpu_custom_call.1} parent=39 // pred_region
          %263 = dma.done %s255, 1280
        $region44: #{tpu_custom_call.1} parent=39 // pred_fallthru
          _
        // Predicated region
        $region45: #{tpu_custom_call.1} parent=39 // pred_check
          %p264 = pneg %p79
        $region46: #{tpu_custom_call.1} parent=39 // pred_check_branch
          %266 = sbr.rel (%p264) target = $region48
        $region47: #{tpu_custom_call.1} parent=39 // pred_region
          %268 = dma.done [#allocation7], 1024
        $region48: #{tpu_custom_call.1} parent=39 // pred_fallthru
          _
        // Predicated region
        $region49: #{tpu_custom_call.1} parent=39 // pred_check
          %p269 = pneg %p121
        $region50: #{tpu_custom_call.1} parent=39 // pred_check_branch
          %271 = sbr.rel (%p269) target = $region52
        $region51: #{tpu_custom_call.1} parent=39 // pred_region
          %273 = dma.done [#allocation7], 9216
        $region52: #{tpu_custom_call.1} parent=39 // pred_fallthru
          _
        %s274 = sand.u32 %s45, 1
        %s275 = scalar_lea.sflag [#allocation4], %s274
        %s276 = sand.u32 %s45, 1
        %s277 = smul.addr %s276, 80
        %s278 = scalar_lea.vmem [#allocation3], %s277
        %p279 = pneg %p58
        %p280 = pneg %p55
        %p281 = pneg %p79
        %p282 = pneg %p76
        %p283 = pneg %p100
        %p284 = pneg %p97
        %p285 = pneg %p121
        %p286 = pneg %p118
        %p287 = pneg %p142
        %p288 = pneg %p139
        %p289 = pneg %p170
        %p290 = pneg %p167
        %s291 = sand.u32 %s157, 1
        %s292 = scalar_lea.sflag [#allocation5], %s291
        %s293 = sand.u32 %s157, 1
        %s294 = smul.addr %s293, 128
        %s295 = scalar_lea.vmem [#allocation9], %s294
        %s296 = smul.u32 8, %s28
        %v298 = vld [vmem:[%s258] sm:$0xf]
        %v299 = vld [vmem:[%s258 + $0x4] sm:$0xf]
        %v300 = vld [vmem:[%s258 + $0x8] sm:$0xf]
        %v301 = vld [vmem:[%s258 + $0xc] sm:$0xf]
        %v302 = vld [vmem:[%s258 + $0x10] sm:$0xf]
        %v303 = vld [vmem:[%s258 + $0x14] sm:$0xf]
        %v304 = vld [vmem:[%s258 + $0x18] sm:$0xf]
        %v305 = vld [vmem:[%s258 + $0x1c] sm:$0xf]
        %v306 = vld [vmem:[%s258 + $0x20] sm:$0xf]
        %v307 = vld [vmem:[%s258 + $0x24] sm:$0xf]
        %v308 = vld [vmem:[%s258 + $0x28] sm:$0xf]
        %v309 = vld [vmem:[%s258 + $0x2c] sm:$0xf]
        %v310 = vld [vmem:[%s258 + $0x30] sm:$0xf]
        %v311 = vld [vmem:[%s258 + $0x34] sm:$0xf]
        %v312 = vld [vmem:[%s258 + $0x38] sm:$0xf]
        %v313 = vld [vmem:[%s258 + $0x3c] sm:$0xf]
        %v314 = vld [vmem:[%s258 + $0x40] sm:$0xf]
        %v315 = vld [vmem:[%s258 + $0x44] sm:$0xf]
        %v316 = vld [vmem:[%s258 + $0x48] sm:$0xf]
        %v317 = vld [vmem:[%s258 + $0x4c] sm:$0xf]
        %v318 = vld [vmem:[#allocation6] sm:$0xf]
        %v319 = vld [vmem:[#allocation6 + $0x4] sm:$0xf]
        %v320 = vld [vmem:[#allocation6 + $0x8] sm:$0xf]
        %v321 = vld [vmem:[#allocation6 + $0xc] sm:$0xf]
        %v322 = vld [vmem:[#allocation6 + $0x10] sm:$0xf]
        %v323 = vld [vmem:[#allocation6 + $0x14] sm:$0xf]
        %v324 = vld [vmem:[#allocation6 + $0x18] sm:$0xf]
        %v325 = vld [vmem:[#allocation6 + $0x1c] sm:$0xf]
        %v326 = vld [vmem:[#allocation6 + $0x20] sm:$0xf]
        %v327 = vld [vmem:[#allocation6 + $0x24] sm:$0xf]
        %v328 = vld [vmem:[#allocation6 + $0x28] sm:$0xf]
        %v329 = vld [vmem:[#allocation6 + $0x2c] sm:$0xf]
        %v330 = vld [vmem:[#allocation6 + $0x30] sm:$0xf]
        %v331 = vld [vmem:[#allocation6 + $0x34] sm:$0xf]
        %v332 = vld [vmem:[#allocation6 + $0x38] sm:$0xf]
        %v333 = vld [vmem:[#allocation6 + $0x3c] sm:$0xf]
        %v334 = vld [vmem:[%s2] sm:$0x1]
        %v336 = vperm.slane %v334, 0
        %v358 = vunpack.c.l.b16 %v298
        %v359 = vunpack.c.l.b16 %v299
        %v360 = vunpack.c.l.b16 %v300
        %v361 = vunpack.c.l.b16 %v301
        %v362 = vunpack.c.l.b16 %v302
        %v363 = vunpack.c.l.b16 %v303
        %v364 = vunpack.c.l.b16 %v304
        %v365 = vunpack.c.l.b16 %v305
        %v366 = vunpack.c.l.b16 %v306
        %v367 = vunpack.c.l.b16 %v307
        %v368 = vunpack.c.l.b16 %v308
        %v369 = vunpack.c.l.b16 %v309
        %v370 = vunpack.c.l.b16 %v310
        %v371 = vunpack.c.l.b16 %v311
        %v372 = vunpack.c.l.b16 %v312
        %v373 = vunpack.c.l.b16 %v313
        %v374 = vunpack.c.l.b16 %v314
        %v375 = vunpack.c.l.b16 %v315
        %v376 = vunpack.c.l.b16 %v316
        %v377 = vunpack.c.l.b16 %v317
        %v378 = vpack.c.b16 %v359, %v358
        %v379 = vpack.c.b16 %v361, %v360
        %v380 = vpack.c.b16 %v363, %v362
        %v381 = vpack.c.b16 %v365, %v364
        %v382 = vpack.c.b16 %v367, %v366
        %v383 = vpack.c.b16 %v369, %v368
        %v384 = vpack.c.b16 %v371, %v370
        %v385 = vpack.c.b16 %v373, %v372
        %v386 = vpack.c.b16 %v375, %v374
        %v387 = vpack.c.b16 %v377, %v376
        %v414 = vunpack.c.l.b16 %v318
        %v415 = vunpack.c.l.b16 %v319
        %v416 = vunpack.c.l.b16 %v320
        %v417 = vunpack.c.l.b16 %v321
        %v418 = vunpack.c.l.b16 %v322
        %v419 = vunpack.c.l.b16 %v323
        %v420 = vunpack.c.l.b16 %v324
        %v421 = vunpack.c.l.b16 %v325
        %v422 = vunpack.c.l.b16 %v326
        %v423 = vunpack.c.l.b16 %v327
        %v424 = vunpack.c.l.b16 %v328
        %v425 = vunpack.c.l.b16 %v329
        %v426 = vunpack.c.l.b16 %v330
        %v427 = vunpack.c.l.b16 %v331
        %v428 = vunpack.c.l.b16 %v332
        %v429 = vunpack.c.l.b16 %v333
        %v430 = vpack.c.b16 %v415, %v414
        %v431 = vpack.c.b16 %v417, %v416
        %v432 = vpack.c.b16 %v419, %v418
        %v433 = vpack.c.b16 %v421, %v420
        %v434 = vpack.c.b16 %v423, %v422
        %v435 = vpack.c.b16 %v425, %v424
        %v436 = vpack.c.b16 %v427, %v426
        %v437 = vpack.c.b16 %v429, %v428
        %446 = vmatpush.bf16.msra.mxu0 %v437
        %447 = vmatpush.bf16.msra.mxu0 %v436
        %448 = vmatpush.bf16.msra.mxu0 %v435
        %449 = vmatpush.bf16.msra.mxu0 %v434
        %450 = vmatpush.bf16.msra.mxu0 %v433
        %451 = vmatpush.bf16.msra.mxu0 %v432
        %452 = vmatpush.bf16.msra.mxu0 %v431
        %453 = vmatpush.bf16.msra.mxu0 %v430
        %454 = vmatmul.bf16.gmra.mxu0 %v378
        %v455 = vpop.f32.mrf.mxu0
        %v456 = vadd.f32 %v336, %v455
        %v457 = vpop.f32.mrf.mxu0
        %v458 = vadd.f32 %v336, %v457
        %459 = vmatmul.bf16.gmra.mxu0 %v379
        %v460 = vpop.f32.mrf.mxu0
        %v461 = vadd.f32 %v336, %v460
        %v462 = vpop.f32.mrf.mxu0
        %v463 = vadd.f32 %v336, %v462
        %464 = vmatmul.bf16.gmra.mxu0 %v380
        %v465 = vpop.f32.mrf.mxu0
        %v466 = vadd.f32 %v336, %v465
        %v467 = vpop.f32.mrf.mxu0
        %v468 = vadd.f32 %v336, %v467
        %469 = vmatmul.bf16.gmra.mxu0 %v381
        %v470 = vpop.f32.mrf.mxu0
        %v471 = vadd.f32 %v336, %v470
        %v472 = vpop.f32.mrf.mxu0
        %v473 = vadd.f32 %v336, %v472
        %474 = vmatmul.bf16.gmra.mxu0 %v382
        %v475 = vpop.f32.mrf.mxu0
        %v476 = vadd.f32 %v336, %v475
        %v477 = vpop.f32.mrf.mxu0
        %v478 = vadd.f32 %v336, %v477
        %479 = vmatmul.bf16.gmra.mxu0 %v383
        %v480 = vpop.f32.mrf.mxu0
        %v481 = vadd.f32 %v336, %v480
        %v482 = vpop.f32.mrf.mxu0
        %v483 = vadd.f32 %v336, %v482
        %484 = vmatmul.bf16.gmra.mxu0 %v384
        %v485 = vpop.f32.mrf.mxu0
        %v486 = vadd.f32 %v336, %v485
        %v487 = vpop.f32.mrf.mxu0
        %v488 = vadd.f32 %v336, %v487
        %489 = vmatmul.bf16.gmra.mxu0 %v385
        %v490 = vpop.f32.mrf.mxu0
        %v491 = vadd.f32 %v336, %v490
        %v492 = vpop.f32.mrf.mxu0
        %v493 = vadd.f32 %v336, %v492
        %494 = vmatmul.bf16.gmra.mxu0 %v386
        %v495 = vpop.f32.mrf.mxu0
        %v496 = vadd.f32 %v336, %v495
        %v497 = vpop.f32.mrf.mxu0
        %v498 = vadd.f32 %v336, %v497
        %499 = vmatmul.bf16.gmra.mxu0 %v387
        %v500 = vpop.f32.mrf.mxu0
        %v501 = vadd.f32 %v336, %v500
        %v502 = vpop.f32.mrf.mxu0
        %v503 = vadd.f32 %v336, %v502
        %504 = vdwg.mxu0
        %v505 = vmax.f32 %v456, 0.0
        %v506 = vmax.f32 %v458, 0.0
        %v507 = vmax.f32 %v461, 0.0
        %v508 = vmax.f32 %v463, 0.0
        %v509 = vmax.f32 %v466, 0.0
        %v510 = vmax.f32 %v468, 0.0
        %v511 = vmax.f32 %v471, 0.0
        %v512 = vmax.f32 %v473, 0.0
        %v513 = vmax.f32 %v476, 0.0
        %v514 = vmax.f32 %v478, 0.0
        %v515 = vmax.f32 %v481, 0.0
        %v516 = vmax.f32 %v483, 0.0
        %v517 = vmax.f32 %v486, 0.0
        %v518 = vmax.f32 %v488, 0.0
        %v519 = vmax.f32 %v491, 0.0
        %v520 = vmax.f32 %v493, 0.0
        %v521 = vmax.f32 %v496, 0.0
        %v522 = vmax.f32 %v498, 0.0
        %v523 = vmax.f32 %v501, 0.0
        %v524 = vmax.f32 %v503, 0.0
        %v525 = vpack.c.bf16 %v505, %v505
        %v526 = vpack.c.bf16 %v506, %v506
        %v527 = vpack.c.bf16 %v507, %v507
        %v528 = vpack.c.bf16 %v508, %v508
        %v529 = vpack.c.bf16 %v509, %v509
        %v530 = vpack.c.bf16 %v510, %v510
        %v531 = vpack.c.bf16 %v511, %v511
        %v532 = vpack.c.bf16 %v512, %v512
        %v533 = vpack.c.bf16 %v513, %v513
        %v534 = vpack.c.bf16 %v514, %v514
        %v535 = vpack.c.bf16 %v515, %v515
        %v536 = vpack.c.bf16 %v516, %v516
        %v537 = vpack.c.bf16 %v517, %v517
        %v538 = vpack.c.bf16 %v518, %v518
        %v539 = vpack.c.bf16 %v519, %v519
        %v540 = vpack.c.bf16 %v520, %v520
        %v541 = vpack.c.bf16 %v521, %v521
        %v542 = vpack.c.bf16 %v522, %v522
        %v543 = vpack.c.bf16 %v523, %v523
        %v544 = vpack.c.bf16 %v524, %v524
        %vm545 = vsmask.f32 256
        %vm546 = vsmask.f32 4368
        %vm547 = vmor %vm545, %vm546
        %v549 = vshrl.u32 %v525, 16
        %v551 = vrot.slane %v549, 7
        %v552 = vshll.u32 %v525, 16
        %v554 = vor.u32 %v551, %v552
        %v555 = vrot.slane %v551, 4
        %v557 = vshrl.u32 %v526, 16
        %v559 = vrot.slane %v557, 7
        %v560 = vshll.u32 %v526, 16
        %v562 = vor.u32 %v559, %v560
        %v563 = vsel %vm547, %v555, %v562
        %v564 = vrot.slane %v559, 4
        %v566 = vshrl.u32 %v527, 16
        %v568 = vrot.slane %v566, 7
        %v569 = vshll.u32 %v527, 16
        %v571 = vor.u32 %v568, %v569
        %v572 = vrot.slane %v568, 4
        %v574 = vshrl.u32 %v528, 16
        %v576 = vrot.slane %v574, 7
        %v577 = vshll.u32 %v528, 16
        %v579 = vor.u32 %v576, %v577
        %v580 = vsel %vm547, %v572, %v579
        %v581 = vrot.slane %v576, 4
        %v583 = vshrl.u32 %v529, 16
        %v585 = vrot.slane %v583, 7
        %v586 = vshll.u32 %v529, 16
        %v588 = vor.u32 %v585, %v586
        %v589 = vrot.slane %v585, 4
        %v591 = vshrl.u32 %v530, 16
        %v593 = vrot.slane %v591, 7
        %v594 = vshll.u32 %v530, 16
        %v596 = vor.u32 %v593, %v594
        %v597 = vsel %vm547, %v589, %v596
        %v598 = vrot.slane %v593, 4
        %v600 = vshrl.u32 %v531, 16
        %v602 = vrot.slane %v600, 7
        %v603 = vshll.u32 %v531, 16
        %v605 = vor.u32 %v602, %v603
        %v606 = vrot.slane %v602, 4
        %v608 = vshrl.u32 %v532, 16
        %v610 = vrot.slane %v608, 7
        %v611 = vshll.u32 %v532, 16
        %v613 = vor.u32 %v610, %v611
        %v614 = vsel %vm547, %v606, %v613
        %v615 = vrot.slane %v610, 4
        %v617 = vshrl.u32 %v533, 16
        %v619 = vrot.slane %v617, 7
        %v620 = vshll.u32 %v533, 16
        %v622 = vor.u32 %v619, %v620
        %v623 = vrot.slane %v619, 4
        %v625 = vshrl.u32 %v534, 16
        %v627 = vrot.slane %v625, 7
        %v628 = vshll.u32 %v534, 16
        %v630 = vor.u32 %v627, %v628
        %v631 = vsel %vm547, %v623, %v630
        %v632 = vrot.slane %v627, 4
        %v634 = vshrl.u32 %v535, 16
        %v636 = vrot.slane %v634, 7
        %v637 = vshll.u32 %v535, 16
        %v639 = vor.u32 %v636, %v637
        %v640 = vrot.slane %v636, 4
        %v642 = vshrl.u32 %v536, 16
        %v644 = vrot.slane %v642, 7
        %v645 = vshll.u32 %v536, 16
        %v647 = vor.u32 %v644, %v645
        %v648 = vsel %vm547, %v640, %v647
        %v649 = vrot.slane %v644, 4
        %v651 = vshrl.u32 %v537, 16
        %v653 = vrot.slane %v651, 7
        %v654 = vshll.u32 %v537, 16
        %v656 = vor.u32 %v653, %v654
        %v657 = vrot.slane %v653, 4
        %v659 = vshrl.u32 %v538, 16
        %v661 = vrot.slane %v659, 7
        %v662 = vshll.u32 %v538, 16
        %v664 = vor.u32 %v661, %v662
        %v665 = vsel %vm547, %v657, %v664
        %v666 = vrot.slane %v661, 4
        %v668 = vshrl.u32 %v539, 16
        %v670 = vrot.slane %v668, 7
        %v671 = vshll.u32 %v539, 16
        %v673 = vor.u32 %v670, %v671
        %v674 = vrot.slane %v670, 4
        %v676 = vshrl.u32 %v540, 16
        %v678 = vrot.slane %v676, 7
        %v679 = vshll.u32 %v540, 16
        %v681 = vor.u32 %v678, %v679
        %v682 = vsel %vm547, %v674, %v681
        %v683 = vrot.slane %v678, 4
        %v685 = vshrl.u32 %v541, 16
        %v687 = vrot.slane %v685, 7
        %v688 = vshll.u32 %v541, 16
        %v690 = vor.u32 %v687, %v688
        %v691 = vrot.slane %v687, 4
        %v693 = vshrl.u32 %v542, 16
        %v695 = vrot.slane %v693, 7
        %v696 = vshll.u32 %v542, 16
        %v698 = vor.u32 %v695, %v696
        %v699 = vsel %vm547, %v691, %v698
        %v700 = vrot.slane %v695, 4
        %v702 = vshrl.u32 %v543, 16
        %v704 = vrot.slane %v702, 7
        %v705 = vshll.u32 %v543, 16
        %v707 = vor.u32 %v704, %v705
        %v708 = vrot.slane %v704, 4
        %v710 = vshrl.u32 %v544, 16
        %v712 = vrot.slane %v710, 7
        %v713 = vshll.u32 %v544, 16
        %v715 = vor.u32 %v712, %v713
        %v716 = vsel %vm547, %v708, %v715
        %v717 = vrot.slane %v712, 4
        %vm748 = vcmask 1043456
        %vm749 = vsmask.f32 7938
        %vm750 = vmand %vm748, %vm749
        %v751 = vld [vmem:[#allocation2] sm:$0xf]
        %v752 = vsel %vm750, %v554, %v751
        %753 = vst [vmem:[#allocation2] sm:$0xf] %v752
        %754 = vst [vmem:[#allocation2 + $0x4] sm:$0xf] %v563
        %vm755 = vcmask 1040384
        %vm756 = vmand %vm755, %vm545
        %v757 = vld [vmem:[#allocation2 + $0x8] sm:$0x1]
        %v758 = vsel %vm756, %v564, %v757
        %759 = vst [vmem:[#allocation2 + $0x8] sm:$0x1] %v758
        %v760 = vld [vmem:[#allocation2 + $0xc] sm:$0xf]
        %v761 = vsel %vm750, %v571, %v760
        %762 = vst [vmem:[#allocation2 + $0xc] sm:$0xf] %v761
        %763 = vst [vmem:[#allocation2 + $0x10] sm:$0xf] %v580
        %v764 = vld [vmem:[#allocation2 + $0x14] sm:$0x1]
        %v765 = vsel %vm756, %v581, %v764
        %766 = vst [vmem:[#allocation2 + $0x14] sm:$0x1] %v765
        %v767 = vld [vmem:[#allocation2 + $0x18] sm:$0xf]
        %v768 = vsel %vm750, %v588, %v767
        %769 = vst [vmem:[#allocation2 + $0x18] sm:$0xf] %v768
        %770 = vst [vmem:[#allocation2 + $0x1c] sm:$0xf] %v597
        %v771 = vld [vmem:[#allocation2 + $0x20] sm:$0x1]
        %v772 = vsel %vm756, %v598, %v771
        %773 = vst [vmem:[#allocation2 + $0x20] sm:$0x1] %v772
        %v774 = vld [vmem:[#allocation2 + $0x24] sm:$0xf]
        %v775 = vsel %vm750, %v605, %v774
        %776 = vst [vmem:[#allocation2 + $0x24] sm:$0xf] %v775
        %777 = vst [vmem:[#allocation2 + $0x28] sm:$0xf] %v614
        %v778 = vld [vmem:[#allocation2 + $0x2c] sm:$0x1]
        %v779 = vsel %vm756, %v615, %v778
        %780 = vst [vmem:[#allocation2 + $0x2c] sm:$0x1] %v779
        %v781 = vld [vmem:[#allocation2 + $0x30] sm:$0xf]
        %v782 = vsel %vm750, %v622, %v781
        %783 = vst [vmem:[#allocation2 + $0x30] sm:$0xf] %v782
        %784 = vst [vmem:[#allocation2 + $0x34] sm:$0xf] %v631
        %v785 = vld [vmem:[#allocation2 + $0x38] sm:$0x1]
        %v786 = vsel %vm756, %v632, %v785
        %787 = vst [vmem:[#allocation2 + $0x38] sm:$0x1] %v786
        %v788 = vld [vmem:[#allocation2 + $0x3c] sm:$0xf]
        %v789 = vsel %vm750, %v639, %v788
        %790 = vst [vmem:[#allocation2 + $0x3c] sm:$0xf] %v789
        %791 = vst [vmem:[#allocation2 + $0x40] sm:$0xf] %v648
        %v792 = vld [vmem:[#allocation2 + $0x44] sm:$0x1]
        %v793 = vsel %vm756, %v649, %v792
        %794 = vst [vmem:[#allocation2 + $0x44] sm:$0x1] %v793
        %v795 = vld [vmem:[#allocation2 + $0x48] sm:$0xf]
        %v796 = vsel %vm750, %v656, %v795
        %797 = vst [vmem:[#allocation2 + $0x48] sm:$0xf] %v796
        %798 = vst [vmem:[#allocation2 + $0x4c] sm:$0xf] %v665
        %v799 = vld [vmem:[#allocation2 + $0x50] sm:$0x1]
        %v800 = vsel %vm756, %v666, %v799
        %801 = vst [vmem:[#allocation2 + $0x50] sm:$0x1] %v800
        %v802 = vld [vmem:[#allocation2 + $0x54] sm:$0xf]
        %v803 = vsel %vm750, %v673, %v802
        %804 = vst [vmem:[#allocation2 + $0x54] sm:$0xf] %v803
        %805 = vst [vmem:[#allocation2 + $0x58] sm:$0xf] %v682
        %v806 = vld [vmem:[#allocation2 + $0x5c] sm:$0x1]
        %v807 = vsel %vm756, %v683, %v806
        %808 = vst [vmem:[#allocation2 + $0x5c] sm:$0x1] %v807
        %v809 = vld [vmem:[#allocation2 + $0x60] sm:$0xf]
        %v810 = vsel %vm750, %v690, %v809
        %811 = vst [vmem:[#allocation2 + $0x60] sm:$0xf] %v810
        %812 = vst [vmem:[#allocation2 + $0x64] sm:$0xf] %v699
        %v813 = vld [vmem:[#allocation2 + $0x68] sm:$0x1]
        %v814 = vsel %vm756, %v700, %v813
        %815 = vst [vmem:[#allocation2 + $0x68] sm:$0x1] %v814
        %v816 = vld [vmem:[#allocation2 + $0x6c] sm:$0xf]
        %v817 = vsel %vm750, %v707, %v816
        %818 = vst [vmem:[#allocation2 + $0x6c] sm:$0xf] %v817
        %819 = vst [vmem:[#allocation2 + $0x70] sm:$0xf] %v716
        %v820 = vld [vmem:[#allocation2 + $0x74] sm:$0x1]
        %v821 = vsel %vm756, %v717, %v820
        %822 = vst [vmem:[#allocation2 + $0x74] sm:$0x1] %v821
        %v823 = vld [vmem:[#allocation2] sm:$0x1]
        %v824 = vsel %vm756, 0, %v823
        %825 = vst [vmem:[#allocation2] sm:$0x1] %v824
        %v826 = vld [vmem:[#allocation2 + $0xc] sm:$0x1]
        %v827 = vsel %vm756, 0, %v826
        %828 = vst [vmem:[#allocation2 + $0xc] sm:$0x1] %v827
        %v829 = vld [vmem:[#allocation2 + $0x18] sm:$0x1]
        %v830 = vsel %vm756, 0, %v829
        %831 = vst [vmem:[#allocation2 + $0x18] sm:$0x1] %v830
        %v832 = vld [vmem:[#allocation2 + $0x24] sm:$0x1]
        %v833 = vsel %vm756, 0, %v832
        %834 = vst [vmem:[#allocation2 + $0x24] sm:$0x1] %v833
        %v835 = vld [vmem:[#allocation2 + $0x30] sm:$0x1]
        %v836 = vsel %vm756, 0, %v835
        %837 = vst [vmem:[#allocation2 + $0x30] sm:$0x1] %v836
        %v838 = vld [vmem:[#allocation2 + $0x3c] sm:$0x1]
        %v839 = vsel %vm756, 0, %v838
        %840 = vst [vmem:[#allocation2 + $0x3c] sm:$0x1] %v839
        %v841 = vld [vmem:[#allocation2 + $0x48] sm:$0x1]
        %v842 = vsel %vm756, 0, %v841
        %843 = vst [vmem:[#allocation2 + $0x48] sm:$0x1] %v842
        %v844 = vld [vmem:[#allocation2 + $0x54] sm:$0x1]
        %v845 = vsel %vm756, 0, %v844
        %846 = vst [vmem:[#allocation2 + $0x54] sm:$0x1] %v845
        %v847 = vld [vmem:[#allocation2 + $0x60] sm:$0x1]
        %v848 = vsel %vm756, 0, %v847
        %849 = vst [vmem:[#allocation2 + $0x60] sm:$0x1] %v848
        %v850 = vld [vmem:[#allocation2 + $0x6c] sm:$0x1]
        %v851 = vsel %vm756, 0, %v850
        %852 = vst [vmem:[#allocation2 + $0x6c] sm:$0x1] %v851
        %vm853 = vmand %vm755, %vm749
        %v854 = vld [vmem:[#allocation2 + $0x8] sm:$0x1]
        %v855 = vsel %vm853, 0, %v854
        %856 = vst [vmem:[#allocation2 + $0x8] sm:$0x1] %v855
        %v857 = vld [vmem:[#allocation2 + $0x14] sm:$0x1]
        %v858 = vsel %vm853, 0, %v857
        %859 = vst [vmem:[#allocation2 + $0x14] sm:$0x1] %v858
        %v860 = vld [vmem:[#allocation2 + $0x20] sm:$0x1]
        %v861 = vsel %vm853, 0, %v860
        %862 = vst [vmem:[#allocation2 + $0x20] sm:$0x1] %v861
        %v863 = vld [vmem:[#allocation2 + $0x2c] sm:$0x1]
        %v864 = vsel %vm853, 0, %v863
        %865 = vst [vmem:[#allocation2 + $0x2c] sm:$0x1] %v864
        %v866 = vld [vmem:[#allocation2 + $0x38] sm:$0x1]
        %v867 = vsel %vm853, 0, %v866
        %868 = vst [vmem:[#allocation2 + $0x38] sm:$0x1] %v867
        %v869 = vld [vmem:[#allocation2 + $0x44] sm:$0x1]
        %v870 = vsel %vm853, 0, %v869
        %871 = vst [vmem:[#allocation2 + $0x44] sm:$0x1] %v870
        %v872 = vld [vmem:[#allocation2 + $0x50] sm:$0x1]
        %v873 = vsel %vm853, 0, %v872
        %874 = vst [vmem:[#allocation2 + $0x50] sm:$0x1] %v873
        %v875 = vld [vmem:[#allocation2 + $0x5c] sm:$0x1]
        %v876 = vsel %vm853, 0, %v875
        %877 = vst [vmem:[#allocation2 + $0x5c] sm:$0x1] %v876
        %v878 = vld [vmem:[#allocation2 + $0x68] sm:$0x1]
        %v879 = vsel %vm853, 0, %v878
        %880 = vst [vmem:[#allocation2 + $0x68] sm:$0x1] %v879
        %v881 = vld [vmem:[#allocation2 + $0x74] sm:$0x1]
        %v882 = vsel %vm853, 0, %v881
        %883 = vst [vmem:[#allocation2 + $0x74] sm:$0x1] %v882
        %p884 = scmp.eq.s32.totalorder %s28, 0
        // Predicated region
        $region53: #{tpu_custom_call.1} parent=39 // pred_check
          %p885 = pneg %p884
        $region54: #{tpu_custom_call.1} parent=39 // pred_check_branch
          %887 = sbr.rel (%p885) target = $region56
        $region55: #{tpu_custom_call.1} parent=39 // pred_region
          %888 = vst [vmem:[#allocation2] sm:$0xf] 0
          %889 = vst [vmem:[#allocation2 + $0x4] sm:$0xf] 0
          %890 = vst [vmem:[#allocation2 + $0x8] sm:$0x1] 0
        $region56: #{tpu_custom_call.1} parent=39 // pred_fallthru
          _
        %p891 = scmp.eq.s32.totalorder %s28, 1
        // Predicated region
        $region57: #{tpu_custom_call.1} parent=39 // pred_check
          %p892 = pneg %p891
        $region58: #{tpu_custom_call.1} parent=39 // pred_check_branch
          %894 = sbr.rel (%p892) target = $region60
        $region59: #{tpu_custom_call.1} parent=39 // pred_region
          %s895 = scalar_lea.vmem [#allocation2], 108
          %896 = vst [vmem:[%s895] sm:$0xf] 0
          %897 = vst [vmem:[%s895 + $0x4] sm:$0xf] 0
          %898 = vst [vmem:[%s895 + $0x8] sm:$0x1] 0
        $region60: #{tpu_custom_call.1} parent=39 // pred_fallthru
          _
        %v899 = vld [vmem:[#allocation2] sm:$0xf]
        %v900 = vld [vmem:[#allocation2 + $0x4] sm:$0xf]
        %v901 = vld [vmem:[#allocation2 + $0x8] sm:$0x1]
        %v902 = vld [vmem:[#allocation2 + $0xc] sm:$0xf]
        %v903 = vld [vmem:[#allocation2 + $0x10] sm:$0xf]
        %v904 = vld [vmem:[#allocation2 + $0x14] sm:$0x1]
        %v905 = vld [vmem:[#allocation2 + $0x18] sm:$0xf]
        %v906 = vld [vmem:[#allocation2 + $0x1c] sm:$0xf]
        %v907 = vld [vmem:[#allocation2 + $0x20] sm:$0x1]
        %v908 = vld [vmem:[#allocation2 + $0x24] sm:$0xf]
        %v909 = vld [vmem:[#allocation2 + $0x28] sm:$0xf]
        %v910 = vld [vmem:[#allocation2 + $0x2c] sm:$0x1]
        %v911 = vld [vmem:[#allocation2 + $0x30] sm:$0xf]
        %v912 = vld [vmem:[#allocation2 + $0x34] sm:$0xf]
        %v913 = vld [vmem:[#allocation2 + $0x38] sm:$0x1]
        %v914 = vld [vmem:[#allocation2 + $0x3c] sm:$0xf]
        %v915 = vld [vmem:[#allocation2 + $0x40] sm:$0xf]
        %v916 = vld [vmem:[#allocation2 + $0x44] sm:$0x1]
        %v917 = vld [vmem:[#allocation2 + $0x48] sm:$0xf]
        %v918 = vld [vmem:[#allocation2 + $0x4c] sm:$0xf]
        %v919 = vld [vmem:[#allocation2 + $0x50] sm:$0x1]
        %v920 = vld [vmem:[#allocation2 + $0x54] sm:$0xf]
        %v921 = vld [vmem:[#allocation2 + $0x58] sm:$0xf]
        %v922 = vld [vmem:[#allocation2 + $0x5c] sm:$0x1]
        %v923 = vld [vmem:[#allocation2 + $0x60] sm:$0xf]
        %v924 = vld [vmem:[#allocation2 + $0x64] sm:$0xf]
        %v925 = vld [vmem:[#allocation2 + $0x68] sm:$0x1]
        %v926 = vld [vmem:[#allocation2 + $0x6c] sm:$0xf]
        %v927 = vld [vmem:[#allocation2 + $0x70] sm:$0xf]
        %v928 = vld [vmem:[#allocation2 + $0x74] sm:$0x1]
        %vm929 = vsmask.f32 3328
        %vm930 = vsmask.f32 7440
        %vm931 = vmor %vm929, %vm930
        %v933 = vshrl.u32 %v899, 16
        %v935 = vrot.slane %v933, 4
        %v936 = vshll.u32 %v899, 16
        %v938 = vrot.slane %v936, 5
        %v939 = vor.u32 %v935, %v938
        %v940 = vrot.slane %v939, 4
        %v942 = vshll.u32 %v900, 16
        %v944 = vrot.slane %v942, 5
        %v945 = vsel %vm931, %v940, %v944
        %v946 = vshrl.u32 %v900, 16
        %v948 = vrot.slane %v946, 4
        %v949 = vor.u32 %v948, %v944
        %v950 = vrot.slane %v949, 4
        %v952 = vshll.u32 %v901, 16
        %v954 = vrot.slane %v952, 5
        %v955 = vsel %vm931, %v950, %v954
        %v957 = vshrl.u32 %v902, 16
        %v959 = vrot.slane %v957, 4
        %v960 = vshll.u32 %v902, 16
        %v962 = vrot.slane %v960, 5
        %v963 = vor.u32 %v959, %v962
        %v964 = vrot.slane %v963, 4
        %v966 = vshll.u32 %v903, 16
        %v968 = vrot.slane %v966, 5
        %v969 = vsel %vm931, %v964, %v968
        %v970 = vshrl.u32 %v903, 16
        %v972 = vrot.slane %v970, 4
        %v973 = vor.u32 %v972, %v968
        %v974 = vrot.slane %v973, 4
        %v976 = vshll.u32 %v904, 16
        %v978 = vrot.slane %v976, 5
        %v979 = vsel %vm931, %v974, %v978
        %v981 = vshrl.u32 %v905, 16
        %v983 = vrot.slane %v981, 4
        %v984 = vshll.u32 %v905, 16
        %v986 = vrot.slane %v984, 5
        %v987 = vor.u32 %v983, %v986
        %v988 = vrot.slane %v987, 4
        %v990 = vshll.u32 %v906, 16
        %v992 = vrot.slane %v990, 5
        %v993 = vsel %vm931, %v988, %v992
        %v994 = vshrl.u32 %v906, 16
        %v996 = vrot.slane %v994, 4
        %v997 = vor.u32 %v996, %v992
        %v998 = vrot.slane %v997, 4
        %v1000 = vshll.u32 %v907, 16
        %v1002 = vrot.slane %v1000, 5
        %v1003 = vsel %vm931, %v998, %v1002
        %v1005 = vshrl.u32 %v908, 16
        %v1007 = vrot.slane %v1005, 4
        %v1008 = vshll.u32 %v908, 16
        %v1010 = vrot.slane %v1008, 5
        %v1011 = vor.u32 %v1007, %v1010
        %v1012 = vrot.slane %v1011, 4
        %v1014 = vshll.u32 %v909, 16
        %v1016 = vrot.slane %v1014, 5
        %v1017 = vsel %vm931, %v1012, %v1016
        %v1018 = vshrl.u32 %v909, 16
        %v1020 = vrot.slane %v1018, 4
        %v1021 = vor.u32 %v1020, %v1016
        %v1022 = vrot.slane %v1021, 4
        %v1024 = vshll.u32 %v910, 16
        %v1026 = vrot.slane %v1024, 5
        %v1027 = vsel %vm931, %v1022, %v1026
        %v1029 = vshrl.u32 %v911, 16
        %v1031 = vrot.slane %v1029, 4
        %v1032 = vshll.u32 %v911, 16
        %v1034 = vrot.slane %v1032, 5
        %v1035 = vor.u32 %v1031, %v1034
        %v1036 = vrot.slane %v1035, 4
        %v1038 = vshll.u32 %v912, 16
        %v1040 = vrot.slane %v1038, 5
        %v1041 = vsel %vm931, %v1036, %v1040
        %v1042 = vshrl.u32 %v912, 16
        %v1044 = vrot.slane %v1042, 4
        %v1045 = vor.u32 %v1044, %v1040
        %v1046 = vrot.slane %v1045, 4
        %v1048 = vshll.u32 %v913, 16
        %v1050 = vrot.slane %v1048, 5
        %v1051 = vsel %vm931, %v1046, %v1050
        %v1053 = vshrl.u32 %v914, 16
        %v1055 = vrot.slane %v1053, 4
        %v1056 = vshll.u32 %v914, 16
        %v1058 = vrot.slane %v1056, 5
        %v1059 = vor.u32 %v1055, %v1058
        %v1060 = vrot.slane %v1059, 4
        %v1062 = vshll.u32 %v915, 16
        %v1064 = vrot.slane %v1062, 5
        %v1065 = vsel %vm931, %v1060, %v1064
        %v1066 = vshrl.u32 %v915, 16
        %v1068 = vrot.slane %v1066, 4
        %v1069 = vor.u32 %v1068, %v1064
        %v1070 = vrot.slane %v1069, 4
        %v1072 = vshll.u32 %v916, 16
        %v1074 = vrot.slane %v1072, 5
        %v1075 = vsel %vm931, %v1070, %v1074
        %v1077 = vshrl.u32 %v917, 16
        %v1079 = vrot.slane %v1077, 4
        %v1080 = vshll.u32 %v917, 16
        %v1082 = vrot.slane %v1080, 5
        %v1083 = vor.u32 %v1079, %v1082
        %v1084 = vrot.slane %v1083, 4
        %v1086 = vshll.u32 %v918, 16
        %v1088 = vrot.slane %v1086, 5
        %v1089 = vsel %vm931, %v1084, %v1088
        %v1090 = vshrl.u32 %v918, 16
        %v1092 = vrot.slane %v1090, 4
        %v1093 = vor.u32 %v1092, %v1088
        %v1094 = vrot.slane %v1093, 4
        %v1096 = vshll.u32 %v919, 16
        %v1098 = vrot.slane %v1096, 5
        %v1099 = vsel %vm931, %v1094, %v1098
        %v1101 = vshrl.u32 %v920, 16
        %v1103 = vrot.slane %v1101, 4
        %v1104 = vshll.u32 %v920, 16
        %v1106 = vrot.slane %v1104, 5
        %v1107 = vor.u32 %v1103, %v1106
        %v1108 = vrot.slane %v1107, 4
        %v1110 = vshll.u32 %v921, 16
        %v1112 = vrot.slane %v1110, 5
        %v1113 = vsel %vm931, %v1108, %v1112
        %v1114 = vshrl.u32 %v921, 16
        %v1116 = vrot.slane %v1114, 4
        %v1117 = vor.u32 %v1116, %v1112
        %v1118 = vrot.slane %v1117, 4
        %v1120 = vshll.u32 %v922, 16
        %v1122 = vrot.slane %v1120, 5
        %v1123 = vsel %vm931, %v1118, %v1122
        %vm1148 = vcmask 1042432
        %vm1149 = vcmask 1046532
        %vm1150 = vmor %vm1148, %vm1149
        %v1151 = vrot.slane %v899, 5
        %v1152 = vrot.slane %v1151, 4
        %v1153 = vrot.slane %v900, 5
        %v1154 = vsel %vm1150, %v1152, %v1153
        %v1155 = vrot.slane %v1153, 4
        %v1156 = vrot.slane %v901, 5
        %v1157 = vsel %vm1150, %v1155, %v1156
        %v1158 = vrot.slane %v902, 5
        %v1159 = vrot.slane %v1158, 4
        %v1160 = vrot.slane %v903, 5
        %v1161 = vsel %vm1150, %v1159, %v1160
        %v1162 = vrot.slane %v1160, 4
        %v1163 = vrot.slane %v904, 5
        %v1164 = vsel %vm1150, %v1162, %v1163
        %v1165 = vrot.slane %v905, 5
        %v1166 = vrot.slane %v1165, 4
        %v1167 = vrot.slane %v906, 5
        %v1168 = vsel %vm1150, %v1166, %v1167
        %v1169 = vrot.slane %v1167, 4
        %v1170 = vrot.slane %v907, 5
        %v1171 = vsel %vm1150, %v1169, %v1170
        %v1172 = vrot.slane %v908, 5
        %v1173 = vrot.slane %v1172, 4
        %v1174 = vrot.slane %v909, 5
        %v1175 = vsel %vm1150, %v1173, %v1174
        %v1176 = vrot.slane %v1174, 4
        %v1177 = vrot.slane %v910, 5
        %v1178 = vsel %vm1150, %v1176, %v1177
        %v1179 = vrot.slane %v911, 5
        %v1180 = vrot.slane %v1179, 4
        %v1181 = vrot.slane %v912, 5
        %v1182 = vsel %vm1150, %v1180, %v1181
        %v1183 = vrot.slane %v1181, 4
        %v1184 = vrot.slane %v913, 5
        %v1185 = vsel %vm1150, %v1183, %v1184
        %v1186 = vrot.slane %v914, 5
        %v1187 = vrot.slane %v1186, 4
        %v1188 = vrot.slane %v915, 5
        %v1189 = vsel %vm1150, %v1187, %v1188
        %v1190 = vrot.slane %v1188, 4
        %v1191 = vrot.slane %v916, 5
        %v1192 = vsel %vm1150, %v1190, %v1191
        %v1193 = vrot.slane %v917, 5
        %v1194 = vrot.slane %v1193, 4
        %v1195 = vrot.slane %v918, 5
        %v1196 = vsel %vm1150, %v1194, %v1195
        %v1197 = vrot.slane %v1195, 4
        %v1198 = vrot.slane %v919, 5
        %v1199 = vsel %vm1150, %v1197, %v1198
        %v1200 = vrot.slane %v920, 5
        %v1201 = vrot.slane %v1200, 4
        %v1202 = vrot.slane %v921, 5
        %v1203 = vsel %vm1150, %v1201, %v1202
        %v1204 = vrot.slane %v1202, 4
        %v1205 = vrot.slane %v922, 5
        %v1206 = vsel %vm1150, %v1204, %v1205
        %v1208 = vshrl.u32 %v923, 16
        %v1210 = vrot.slane %v1208, 4
        %v1211 = vshll.u32 %v923, 16
        %v1213 = vrot.slane %v1211, 5
        %v1214 = vor.u32 %v1210, %v1213
        %v1215 = vrot.slane %v1214, 4
        %v1217 = vshll.u32 %v924, 16
        %v1219 = vrot.slane %v1217, 5
        %v1220 = vsel %vm931, %v1215, %v1219
        %v1221 = vshrl.u32 %v924, 16
        %v1223 = vrot.slane %v1221, 4
        %v1224 = vor.u32 %v1223, %v1219
        %v1225 = vrot.slane %v1224, 4
        %v1227 = vshll.u32 %v925, 16
        %v1229 = vrot.slane %v1227, 5
        %v1230 = vsel %vm931, %v1225, %v1229
        %v1234 = vrot.slane %v923, 5
        %v1235 = vrot.slane %v1234, 4
        %v1236 = vrot.slane %v924, 5
        %v1237 = vsel %vm1150, %v1235, %v1236
        %v1238 = vrot.slane %v1236, 4
        %v1239 = vrot.slane %v925, 5
        %v1240 = vsel %vm1150, %v1238, %v1239
        %v1242 = vshrl.u32 %v926, 16
        %v1244 = vrot.slane %v1242, 4
        %v1245 = vshll.u32 %v926, 16
        %v1247 = vrot.slane %v1245, 5
        %v1248 = vor.u32 %v1244, %v1247
        %v1249 = vrot.slane %v1248, 4
        %v1251 = vshll.u32 %v927, 16
        %v1253 = vrot.slane %v1251, 5
        %v1254 = vsel %vm931, %v1249, %v1253
        %v1255 = vshrl.u32 %v927, 16
        %v1257 = vrot.slane %v1255, 4
        %v1258 = vor.u32 %v1257, %v1253
        %v1259 = vrot.slane %v1258, 4
        %v1261 = vshll.u32 %v928, 16
        %v1263 = vrot.slane %v1261, 5
        %v1264 = vsel %vm931, %v1259, %v1263
        %v1268 = vrot.slane %v926, 5
        %v1269 = vrot.slane %v1268, 4
        %v1270 = vrot.slane %v927, 5
        %v1271 = vsel %vm1150, %v1269, %v1270
        %v1272 = vrot.slane %v1270, 4
        %v1273 = vrot.slane %v928, 5
        %v1274 = vsel %vm1150, %v1272, %v1273
        %v1275 = vunpack.c.l.b16 %v899
        %v1276 = vunpack.c.l.b16 %v900
        %v1277 = vunpack.c.l.b16 %v902
        %v1278 = vunpack.c.l.b16 %v903
        %v1279 = vunpack.c.l.b16 %v905
        %v1280 = vunpack.c.l.b16 %v906
        %v1281 = vunpack.c.l.b16 %v908
        %v1282 = vunpack.c.l.b16 %v909
        %v1283 = vunpack.c.l.b16 %v911
        %v1284 = vunpack.c.l.b16 %v912
        %v1285 = vunpack.c.l.b16 %v914
        %v1286 = vunpack.c.l.b16 %v915
        %v1287 = vunpack.c.l.b16 %v917
        %v1288 = vunpack.c.l.b16 %v918
        %v1289 = vunpack.c.l.b16 %v920
        %v1290 = vunpack.c.l.b16 %v921
        %v1291 = vpack.c.b16 %v1276, %v1275
        %v1292 = vpack.c.b16 %v1278, %v1277
        %v1293 = vpack.c.b16 %v1280, %v1279
        %v1294 = vpack.c.b16 %v1282, %v1281
        %v1295 = vpack.c.b16 %v1284, %v1283
        %v1296 = vpack.c.b16 %v1286, %v1285
        %v1297 = vpack.c.b16 %v1288, %v1287
        %v1298 = vpack.c.b16 %v1290, %v1289
        %v1307 = vunpack.c.l.b16 %v945
        %v1308 = vunpack.c.l.b16 %v955
        %v1309 = vunpack.c.l.b16 %v969
        %v1310 = vunpack.c.l.b16 %v979
        %v1311 = vunpack.c.l.b16 %v993
        %v1312 = vunpack.c.l.b16 %v1003
        %v1313 = vunpack.c.l.b16 %v1017
        %v1314 = vunpack.c.l.b16 %v1027
        %v1315 = vunpack.c.l.b16 %v1041
        %v1316 = vunpack.c.l.b16 %v1051
        %v1317 = vunpack.c.l.b16 %v1065
        %v1318 = vunpack.c.l.b16 %v1075
        %v1319 = vunpack.c.l.b16 %v1089
        %v1320 = vunpack.c.l.b16 %v1099
        %v1321 = vunpack.c.l.b16 %v1113
        %v1322 = vunpack.c.l.b16 %v1123
        %v1323 = vpack.c.b16 %v1308, %v1307
        %v1324 = vpack.c.b16 %v1310, %v1309
        %v1325 = vpack.c.b16 %v1312, %v1311
        %v1326 = vpack.c.b16 %v1314, %v1313
        %v1327 = vpack.c.b16 %v1316, %v1315
        %v1328 = vpack.c.b16 %v1318, %v1317
        %v1329 = vpack.c.b16 %v1320, %v1319
        %v1330 = vpack.c.b16 %v1322, %v1321
        %v1339 = vunpack.c.l.b16 %v1154
        %v1340 = vunpack.c.l.b16 %v1157
        %v1341 = vunpack.c.l.b16 %v1161
        %v1342 = vunpack.c.l.b16 %v1164
        %v1343 = vunpack.c.l.b16 %v1168
        %v1344 = vunpack.c.l.b16 %v1171
        %v1345 = vunpack.c.l.b16 %v1175
        %v1346 = vunpack.c.l.b16 %v1178
        %v1347 = vunpack.c.l.b16 %v1182
        %v1348 = vunpack.c.l.b16 %v1185
        %v1349 = vunpack.c.l.b16 %v1189
        %v1350 = vunpack.c.l.b16 %v1192
        %v1351 = vunpack.c.l.b16 %v1196
        %v1352 = vunpack.c.l.b16 %v1199
        %v1353 = vunpack.c.l.b16 %v1203
        %v1354 = vunpack.c.l.b16 %v1206
        %v1355 = vpack.c.b16 %v1340, %v1339
        %v1356 = vpack.c.b16 %v1342, %v1341
        %v1357 = vpack.c.b16 %v1344, %v1343
        %v1358 = vpack.c.b16 %v1346, %v1345
        %v1359 = vpack.c.b16 %v1348, %v1347
        %v1360 = vpack.c.b16 %v1350, %v1349
        %v1361 = vpack.c.b16 %v1352, %v1351
        %v1362 = vpack.c.b16 %v1354, %v1353
        %v1371 = vunpack.c.l.b16 %v923
        %v1372 = vunpack.c.l.b16 %v924
        %v1373 = vpack.c.b16 %v1372, %v1371
        %v1375 = vunpack.c.l.b16 %v1220
        %v1376 = vunpack.c.l.b16 %v1230
        %v1377 = vpack.c.b16 %v1376, %v1375
        %v1379 = vunpack.c.l.b16 %v1237
        %v1380 = vunpack.c.l.b16 %v1240
        %v1381 = vpack.c.b16 %v1380, %v1379
        %v1383 = vunpack.c.l.b16 %v926
        %v1384 = vunpack.c.l.b16 %v927
        %v1385 = vpack.c.b16 %v1384, %v1383
        %v1387 = vunpack.c.l.b16 %v1254
        %v1388 = vunpack.c.l.b16 %v1264
        %v1389 = vpack.c.b16 %v1388, %v1387
        %v1391 = vunpack.c.l.b16 %v1271
        %v1392 = vunpack.c.l.b16 %v1274
        %v1393 = vpack.c.b16 %v1392, %v1391
        %v1395 = vld [vmem:[#allocation8] sm:$0xf]
        %v1396 = vld [vmem:[#allocation8 + $0x4] sm:$0xf]
        %v1397 = vld [vmem:[#allocation8 + $0x8] sm:$0xf]
        %v1398 = vld [vmem:[#allocation8 + $0xc] sm:$0xf]
        %v1399 = vld [vmem:[#allocation8 + $0x10] sm:$0xf]
        %v1400 = vld [vmem:[#allocation8 + $0x14] sm:$0xf]
        %v1401 = vld [vmem:[#allocation8 + $0x18] sm:$0xf]
        %v1402 = vld [vmem:[#allocation8 + $0x1c] sm:$0xf]
        %v1403 = vld [vmem:[#allocation8 + $0x20] sm:$0xf]
        %v1404 = vld [vmem:[#allocation8 + $0x24] sm:$0xf]
        %v1405 = vld [vmem:[#allocation8 + $0x28] sm:$0xf]
        %v1406 = vld [vmem:[#allocation8 + $0x2c] sm:$0xf]
        %v1407 = vld [vmem:[#allocation8 + $0x30] sm:$0xf]
        %v1408 = vld [vmem:[#allocation8 + $0x34] sm:$0xf]
        %v1409 = vld [vmem:[#allocation8 + $0x38] sm:$0xf]
        %v1410 = vld [vmem:[#allocation8 + $0x3c] sm:$0xf]
        %v1411 = vld [vmem:[#allocation8 + $0x40] sm:$0xf]
        %v1412 = vld [vmem:[#allocation8 + $0x44] sm:$0xf]
        %v1413 = vld [vmem:[#allocation8 + $0x48] sm:$0xf]
        %v1414 = vld [vmem:[#allocation8 + $0x4c] sm:$0xf]
        %v1415 = vld [vmem:[#allocation8 + $0x50] sm:$0xf]
        %v1416 = vld [vmem:[#allocation8 + $0x54] sm:$0xf]
        %v1417 = vld [vmem:[#allocation8 + $0x58] sm:$0xf]
        %v1418 = vld [vmem:[#allocation8 + $0x5c] sm:$0xf]
        %v1419 = vld [vmem:[#allocation8 + $0x60] sm:$0xf]
        %v1420 = vld [vmem:[#allocation8 + $0x64] sm:$0xf]
        %v1421 = vld [vmem:[#allocation8 + $0x68] sm:$0xf]
        %v1422 = vld [vmem:[#allocation8 + $0x6c] sm:$0xf]
        %v1423 = vld [vmem:[#allocation8 + $0x70] sm:$0xf]
        %v1424 = vld [vmem:[#allocation8 + $0x74] sm:$0xf]
        %v1425 = vld [vmem:[#allocation8 + $0x78] sm:$0xf]
        %v1426 = vld [vmem:[#allocation8 + $0x7c] sm:$0xf]
        %v1427 = vld [vmem:[#allocation8 + $0x80] sm:$0xf]
        %v1428 = vld [vmem:[#allocation8 + $0x84] sm:$0xf]
        %v1429 = vld [vmem:[#allocation8 + $0x88] sm:$0xf]
        %v1430 = vld [vmem:[#allocation8 + $0x8c] sm:$0xf]
        %v1431 = vld [vmem:[#allocation8 + $0x90] sm:$0xf]
        %v1432 = vld [vmem:[#allocation8 + $0x94] sm:$0xf]
        %v1433 = vld [vmem:[#allocation8 + $0x98] sm:$0xf]
        %v1434 = vld [vmem:[#allocation8 + $0x9c] sm:$0xf]
        %v1435 = vld [vmem:[#allocation8 + $0xa0] sm:$0xf]
        %v1436 = vld [vmem:[#allocation8 + $0xa4] sm:$0xf]
        %v1437 = vld [vmem:[#allocation8 + $0xa8] sm:$0xf]
        %v1438 = vld [vmem:[#allocation8 + $0xac] sm:$0xf]
        %v1439 = vld [vmem:[#allocation8 + $0xb0] sm:$0xf]
        %v1440 = vld [vmem:[#allocation8 + $0xb4] sm:$0xf]
        %v1441 = vld [vmem:[#allocation8 + $0xb8] sm:$0xf]
        %v1442 = vld [vmem:[#allocation8 + $0xbc] sm:$0xf]
        %v1443 = vld [vmem:[#allocation8 + $0xc0] sm:$0xf]
        %v1444 = vld [vmem:[#allocation8 + $0xc4] sm:$0xf]
        %v1445 = vld [vmem:[#allocation8 + $0xc8] sm:$0xf]
        %v1446 = vld [vmem:[#allocation8 + $0xcc] sm:$0xf]
        %v1447 = vld [vmem:[#allocation8 + $0xd0] sm:$0xf]
        %v1448 = vld [vmem:[#allocation8 + $0xd4] sm:$0xf]
        %v1449 = vld [vmem:[#allocation8 + $0xd8] sm:$0xf]
        %v1450 = vld [vmem:[#allocation8 + $0xdc] sm:$0xf]
        %v1451 = vld [vmem:[#allocation8 + $0xe0] sm:$0xf]
        %v1452 = vld [vmem:[#allocation8 + $0xe4] sm:$0xf]
        %v1453 = vld [vmem:[#allocation8 + $0xe8] sm:$0xf]
        %v1454 = vld [vmem:[#allocation8 + $0xec] sm:$0xf]
        %v1455 = vld [vmem:[#allocation8 + $0xf0] sm:$0xf]
        %v1456 = vld [vmem:[#allocation8 + $0xf4] sm:$0xf]
        %v1457 = vld [vmem:[#allocation8 + $0xf8] sm:$0xf]
        %v1458 = vld [vmem:[#allocation8 + $0xfc] sm:$0xf]
        %v1459 = vld [vmem:[#allocation8 + $0x100] sm:$0xf]
        %v1460 = vld [vmem:[#allocation8 + $0x104] sm:$0xf]
        %v1461 = vld [vmem:[#allocation8 + $0x108] sm:$0xf]
        %v1462 = vld [vmem:[#allocation8 + $0x10c] sm:$0xf]
        %v1463 = vld [vmem:[#allocation8 + $0x110] sm:$0xf]
        %v1464 = vld [vmem:[#allocation8 + $0x114] sm:$0xf]
        %v1465 = vld [vmem:[#allocation8 + $0x118] sm:$0xf]
        %v1466 = vld [vmem:[#allocation8 + $0x11c] sm:$0xf]
        %v1467 = vld [vmem:[#allocation8 + $0x120] sm:$0xf]
        %v1468 = vld [vmem:[#allocation8 + $0x124] sm:$0xf]
        %v1469 = vld [vmem:[#allocation8 + $0x128] sm:$0xf]
        %v1470 = vld [vmem:[#allocation8 + $0x12c] sm:$0xf]
        %v1471 = vld [vmem:[#allocation8 + $0x130] sm:$0xf]
        %v1472 = vld [vmem:[#allocation8 + $0x134] sm:$0xf]
        %v1473 = vld [vmem:[#allocation8 + $0x138] sm:$0xf]
        %v1474 = vld [vmem:[#allocation8 + $0x13c] sm:$0xf]
        %v1475 = vld [vmem:[#allocation8 + $0x140] sm:$0xf]
        %v1476 = vld [vmem:[#allocation8 + $0x144] sm:$0xf]
        %v1477 = vld [vmem:[#allocation8 + $0x148] sm:$0xf]
        %v1478 = vld [vmem:[#allocation8 + $0x14c] sm:$0xf]
        %v1479 = vld [vmem:[#allocation8 + $0x150] sm:$0xf]
        %v1480 = vld [vmem:[#allocation8 + $0x154] sm:$0xf]
        %v1481 = vld [vmem:[#allocation8 + $0x158] sm:$0xf]
        %v1482 = vld [vmem:[#allocation8 + $0x15c] sm:$0xf]
        %v1483 = vld [vmem:[#allocation8 + $0x160] sm:$0xf]
        %v1484 = vld [vmem:[#allocation8 + $0x164] sm:$0xf]
        %v1485 = vld [vmem:[#allocation8 + $0x168] sm:$0xf]
        %v1486 = vld [vmem:[#allocation8 + $0x16c] sm:$0xf]
        %v1487 = vld [vmem:[#allocation8 + $0x170] sm:$0xf]
        %v1488 = vld [vmem:[#allocation8 + $0x174] sm:$0xf]
        %v1489 = vld [vmem:[#allocation8 + $0x178] sm:$0xf]
        %v1490 = vld [vmem:[#allocation8 + $0x17c] sm:$0xf]
        %v1491 = vld [vmem:[#allocation8 + $0x180] sm:$0xf]
        %v1492 = vld [vmem:[#allocation8 + $0x184] sm:$0xf]
        %v1493 = vld [vmem:[#allocation8 + $0x188] sm:$0xf]
        %v1494 = vld [vmem:[#allocation8 + $0x18c] sm:$0xf]
        %v1495 = vld [vmem:[#allocation8 + $0x190] sm:$0xf]
        %v1496 = vld [vmem:[#allocation8 + $0x194] sm:$0xf]
        %v1497 = vld [vmem:[#allocation8 + $0x198] sm:$0xf]
        %v1498 = vld [vmem:[#allocation8 + $0x19c] sm:$0xf]
        %v1499 = vld [vmem:[#allocation8 + $0x1a0] sm:$0xf]
        %v1500 = vld [vmem:[#allocation8 + $0x1a4] sm:$0xf]
        %v1501 = vld [vmem:[#allocation8 + $0x1a8] sm:$0xf]
        %v1502 = vld [vmem:[#allocation8 + $0x1ac] sm:$0xf]
        %v1503 = vld [vmem:[#allocation8 + $0x1b0] sm:$0xf]
        %v1504 = vld [vmem:[#allocation8 + $0x1b4] sm:$0xf]
        %v1505 = vld [vmem:[#allocation8 + $0x1b8] sm:$0xf]
        %v1506 = vld [vmem:[#allocation8 + $0x1bc] sm:$0xf]
        %v1507 = vld [vmem:[#allocation8 + $0x1c0] sm:$0xf]
        %v1508 = vld [vmem:[#allocation8 + $0x1c4] sm:$0xf]
        %v1509 = vld [vmem:[#allocation8 + $0x1c8] sm:$0xf]
        %v1510 = vld [vmem:[#allocation8 + $0x1cc] sm:$0xf]
        %v1511 = vld [vmem:[#allocation8 + $0x1d0] sm:$0xf]
        %v1512 = vld [vmem:[#allocation8 + $0x1d4] sm:$0xf]
        %v1513 = vld [vmem:[#allocation8 + $0x1d8] sm:$0xf]
        %v1514 = vld [vmem:[#allocation8 + $0x1dc] sm:$0xf]
        %v1515 = vld [vmem:[#allocation8 + $0x1e0] sm:$0xf]
        %v1516 = vld [vmem:[#allocation8 + $0x1e4] sm:$0xf]
        %v1517 = vld [vmem:[#allocation8 + $0x1e8] sm:$0xf]
        %v1518 = vld [vmem:[#allocation8 + $0x1ec] sm:$0xf]
        %v1519 = vld [vmem:[#allocation8 + $0x1f0] sm:$0xf]
        %v1520 = vld [vmem:[#allocation8 + $0x1f4] sm:$0xf]
        %v1521 = vld [vmem:[#allocation8 + $0x1f8] sm:$0xf]
        %v1522 = vld [vmem:[#allocation8 + $0x1fc] sm:$0xf]
        %v1523 = vld [vmem:[#allocation8 + $0x200] sm:$0xf]
        %v1524 = vld [vmem:[#allocation8 + $0x204] sm:$0xf]
        %v1525 = vld [vmem:[#allocation8 + $0x208] sm:$0xf]
        %v1526 = vld [vmem:[#allocation8 + $0x20c] sm:$0xf]
        %v1527 = vld [vmem:[#allocation8 + $0x210] sm:$0xf]
        %v1528 = vld [vmem:[#allocation8 + $0x214] sm:$0xf]
        %v1529 = vld [vmem:[#allocation8 + $0x218] sm:$0xf]
        %v1530 = vld [vmem:[#allocation8 + $0x21c] sm:$0xf]
        %v1531 = vld [vmem:[#allocation8 + $0x220] sm:$0xf]
        %v1532 = vld [vmem:[#allocation8 + $0x224] sm:$0xf]
        %v1533 = vld [vmem:[#allocation8 + $0x228] sm:$0xf]
        %v1534 = vld [vmem:[#allocation8 + $0x22c] sm:$0xf]
        %v1535 = vld [vmem:[#allocation8 + $0x230] sm:$0xf]
        %v1536 = vld [vmem:[#allocation8 + $0x234] sm:$0xf]
        %v1537 = vld [vmem:[#allocation8 + $0x238] sm:$0xf]
        %v1538 = vld [vmem:[#allocation8 + $0x23c] sm:$0xf]
        %v1539 = vld [vmem:[%s4] sm:$0x1]
        %v1541 = vperm.slane %v1539, 0
        %v1687 = vunpack.c.l.b16 %v1395
        %v1688 = vunpack.c.l.b16 %v1396
        %v1689 = vunpack.c.l.b16 %v1397
        %v1690 = vunpack.c.l.b16 %v1398
        %v1691 = vunpack.c.l.b16 %v1399
        %v1692 = vunpack.c.l.b16 %v1400
        %v1693 = vunpack.c.l.b16 %v1401
        %v1694 = vunpack.c.l.b16 %v1402
        %v1695 = vunpack.c.l.b16 %v1403
        %v1696 = vunpack.c.l.b16 %v1404
        %v1697 = vunpack.c.l.b16 %v1405
        %v1698 = vunpack.c.l.b16 %v1406
        %v1699 = vunpack.c.l.b16 %v1407
        %v1700 = vunpack.c.l.b16 %v1408
        %v1701 = vunpack.c.l.b16 %v1409
        %v1702 = vunpack.c.l.b16 %v1410
        %v1703 = vunpack.c.l.b16 %v1411
        %v1704 = vunpack.c.l.b16 %v1412
        %v1705 = vunpack.c.l.b16 %v1413
        %v1706 = vunpack.c.l.b16 %v1414
        %v1707 = vunpack.c.l.b16 %v1415
        %v1708 = vunpack.c.l.b16 %v1416
        %v1709 = vunpack.c.l.b16 %v1417
        %v1710 = vunpack.c.l.b16 %v1418
        %v1711 = vunpack.c.l.b16 %v1419
        %v1712 = vunpack.c.l.b16 %v1420
        %v1713 = vunpack.c.l.b16 %v1421
        %v1714 = vunpack.c.l.b16 %v1422
        %v1715 = vunpack.c.l.b16 %v1423
        %v1716 = vunpack.c.l.b16 %v1424
        %v1717 = vunpack.c.l.b16 %v1425
        %v1718 = vunpack.c.l.b16 %v1426
        %v1719 = vunpack.c.l.b16 %v1427
        %v1720 = vunpack.c.l.b16 %v1428
        %v1721 = vunpack.c.l.b16 %v1429
        %v1722 = vunpack.c.l.b16 %v1430
        %v1723 = vunpack.c.l.b16 %v1431
        %v1724 = vunpack.c.l.b16 %v1432
        %v1725 = vunpack.c.l.b16 %v1433
        %v1726 = vunpack.c.l.b16 %v1434
        %v1727 = vunpack.c.l.b16 %v1435
        %v1728 = vunpack.c.l.b16 %v1436
        %v1729 = vunpack.c.l.b16 %v1437
        %v1730 = vunpack.c.l.b16 %v1438
        %v1731 = vunpack.c.l.b16 %v1439
        %v1732 = vunpack.c.l.b16 %v1440
        %v1733 = vunpack.c.l.b16 %v1441
        %v1734 = vunpack.c.l.b16 %v1442
        %v1735 = vunpack.c.l.b16 %v1443
        %v1736 = vunpack.c.l.b16 %v1444
        %v1737 = vunpack.c.l.b16 %v1445
        %v1738 = vunpack.c.l.b16 %v1446
        %v1739 = vunpack.c.l.b16 %v1447
        %v1740 = vunpack.c.l.b16 %v1448
        %v1741 = vunpack.c.l.b16 %v1449
        %v1742 = vunpack.c.l.b16 %v1450
        %v1743 = vunpack.c.l.b16 %v1451
        %v1744 = vunpack.c.l.b16 %v1452
        %v1745 = vunpack.c.l.b16 %v1453
        %v1746 = vunpack.c.l.b16 %v1454
        %v1747 = vunpack.c.l.b16 %v1455
        %v1748 = vunpack.c.l.b16 %v1456
        %v1749 = vunpack.c.l.b16 %v1457
        %v1750 = vunpack.c.l.b16 %v1458
        %v1751 = vunpack.c.l.b16 %v1459
        %v1752 = vunpack.c.l.b16 %v1460
        %v1753 = vunpack.c.l.b16 %v1461
        %v1754 = vunpack.c.l.b16 %v1462
        %v1755 = vunpack.c.l.b16 %v1463
        %v1756 = vunpack.c.l.b16 %v1464
        %v1757 = vunpack.c.l.b16 %v1465
        %v1758 = vunpack.c.l.b16 %v1466
        %v1759 = vunpack.c.l.b16 %v1467
        %v1760 = vunpack.c.l.b16 %v1468
        %v1761 = vunpack.c.l.b16 %v1469
        %v1762 = vunpack.c.l.b16 %v1470
        %v1763 = vunpack.c.l.b16 %v1471
        %v1764 = vunpack.c.l.b16 %v1472
        %v1765 = vunpack.c.l.b16 %v1473
        %v1766 = vunpack.c.l.b16 %v1474
        %v1767 = vunpack.c.l.b16 %v1475
        %v1768 = vunpack.c.l.b16 %v1476
        %v1769 = vunpack.c.l.b16 %v1477
        %v1770 = vunpack.c.l.b16 %v1478
        %v1771 = vunpack.c.l.b16 %v1479
        %v1772 = vunpack.c.l.b16 %v1480
        %v1773 = vunpack.c.l.b16 %v1481
        %v1774 = vunpack.c.l.b16 %v1482
        %v1775 = vunpack.c.l.b16 %v1483
        %v1776 = vunpack.c.l.b16 %v1484
        %v1777 = vunpack.c.l.b16 %v1485
        %v1778 = vunpack.c.l.b16 %v1486
        %v1779 = vunpack.c.l.b16 %v1487
        %v1780 = vunpack.c.l.b16 %v1488
        %v1781 = vunpack.c.l.b16 %v1489
        %v1782 = vunpack.c.l.b16 %v1490
        %v1783 = vunpack.c.l.b16 %v1491
        %v1784 = vunpack.c.l.b16 %v1492
        %v1785 = vunpack.c.l.b16 %v1493
        %v1786 = vunpack.c.l.b16 %v1494
        %v1787 = vunpack.c.l.b16 %v1495
        %v1788 = vunpack.c.l.b16 %v1496
        %v1789 = vunpack.c.l.b16 %v1497
        %v1790 = vunpack.c.l.b16 %v1498
        %v1791 = vunpack.c.l.b16 %v1499
        %v1792 = vunpack.c.l.b16 %v1500
        %v1793 = vunpack.c.l.b16 %v1501
        %v1794 = vunpack.c.l.b16 %v1502
        %v1795 = vunpack.c.l.b16 %v1503
        %v1796 = vunpack.c.l.b16 %v1504
        %v1797 = vunpack.c.l.b16 %v1505
        %v1798 = vunpack.c.l.b16 %v1506
        %v1799 = vunpack.c.l.b16 %v1507
        %v1800 = vunpack.c.l.b16 %v1508
        %v1801 = vunpack.c.l.b16 %v1509
        %v1802 = vunpack.c.l.b16 %v1510
        %v1803 = vunpack.c.l.b16 %v1511
        %v1804 = vunpack.c.l.b16 %v1512
        %v1805 = vunpack.c.l.b16 %v1513
        %v1806 = vunpack.c.l.b16 %v1514
        %v1807 = vunpack.c.l.b16 %v1515
        %v1808 = vunpack.c.l.b16 %v1516
        %v1809 = vunpack.c.l.b16 %v1517
        %v1810 = vunpack.c.l.b16 %v1518
        %v1811 = vunpack.c.l.b16 %v1519
        %v1812 = vunpack.c.l.b16 %v1520
        %v1813 = vunpack.c.l.b16 %v1521
        %v1814 = vunpack.c.l.b16 %v1522
        %v1815 = vunpack.c.l.b16 %v1523
        %v1816 = vunpack.c.l.b16 %v1524
        %v1817 = vunpack.c.l.b16 %v1525
        %v1818 = vunpack.c.l.b16 %v1526
        %v1819 = vunpack.c.l.b16 %v1527
        %v1820 = vunpack.c.l.b16 %v1528
        %v1821 = vunpack.c.l.b16 %v1529
        %v1822 = vunpack.c.l.b16 %v1530
        %v1823 = vunpack.c.l.b16 %v1531
        %v1824 = vunpack.c.l.b16 %v1532
        %v1825 = vunpack.c.l.b16 %v1533
        %v1826 = vunpack.c.l.b16 %v1534
        %v1827 = vunpack.c.l.b16 %v1535
        %v1828 = vunpack.c.l.b16 %v1536
        %v1829 = vunpack.c.l.b16 %v1537
        %v1830 = vunpack.c.l.b16 %v1538
        %v1831 = vpack.c.b16 %v1688, %v1687
        %v1832 = vpack.c.b16 %v1690, %v1689
        %v1833 = vpack.c.b16 %v1692, %v1691
        %v1834 = vpack.c.b16 %v1694, %v1693
        %v1835 = vpack.c.b16 %v1696, %v1695
        %v1836 = vpack.c.b16 %v1698, %v1697
        %v1837 = vpack.c.b16 %v1700, %v1699
        %v1838 = vpack.c.b16 %v1702, %v1701
        %v1839 = vpack.c.b16 %v1704, %v1703
        %v1840 = vpack.c.b16 %v1706, %v1705
        %v1841 = vpack.c.b16 %v1708, %v1707
        %v1842 = vpack.c.b16 %v1710, %v1709
        %v1843 = vpack.c.b16 %v1712, %v1711
        %v1844 = vpack.c.b16 %v1714, %v1713
        %v1845 = vpack.c.b16 %v1716, %v1715
        %v1846 = vpack.c.b16 %v1718, %v1717
        %v1847 = vpack.c.b16 %v1720, %v1719
        %v1848 = vpack.c.b16 %v1722, %v1721
        %v1849 = vpack.c.b16 %v1724, %v1723
        %v1850 = vpack.c.b16 %v1726, %v1725
        %v1851 = vpack.c.b16 %v1728, %v1727
        %v1852 = vpack.c.b16 %v1730, %v1729
        %v1853 = vpack.c.b16 %v1732, %v1731
        %v1854 = vpack.c.b16 %v1734, %v1733
        %v1855 = vpack.c.b16 %v1736, %v1735
        %v1856 = vpack.c.b16 %v1738, %v1737
        %v1857 = vpack.c.b16 %v1740, %v1739
        %v1858 = vpack.c.b16 %v1742, %v1741
        %v1859 = vpack.c.b16 %v1744, %v1743
        %v1860 = vpack.c.b16 %v1746, %v1745
        %v1861 = vpack.c.b16 %v1748, %v1747
        %v1862 = vpack.c.b16 %v1750, %v1749
        %v1863 = vpack.c.b16 %v1752, %v1751
        %v1864 = vpack.c.b16 %v1754, %v1753
        %v1865 = vpack.c.b16 %v1756, %v1755
        %v1866 = vpack.c.b16 %v1758, %v1757
        %v1867 = vpack.c.b16 %v1760, %v1759
        %v1868 = vpack.c.b16 %v1762, %v1761
        %v1869 = vpack.c.b16 %v1764, %v1763
        %v1870 = vpack.c.b16 %v1766, %v1765
        %v1871 = vpack.c.b16 %v1768, %v1767
        %v1872 = vpack.c.b16 %v1770, %v1769
        %v1873 = vpack.c.b16 %v1772, %v1771
        %v1874 = vpack.c.b16 %v1774, %v1773
        %v1875 = vpack.c.b16 %v1776, %v1775
        %v1876 = vpack.c.b16 %v1778, %v1777
        %v1877 = vpack.c.b16 %v1780, %v1779
        %v1878 = vpack.c.b16 %v1782, %v1781
        %v1879 = vpack.c.b16 %v1784, %v1783
        %v1880 = vpack.c.b16 %v1786, %v1785
        %v1881 = vpack.c.b16 %v1788, %v1787
        %v1882 = vpack.c.b16 %v1790, %v1789
        %v1883 = vpack.c.b16 %v1792, %v1791
        %v1884 = vpack.c.b16 %v1794, %v1793
        %v1885 = vpack.c.b16 %v1796, %v1795
        %v1886 = vpack.c.b16 %v1798, %v1797
        %v1887 = vpack.c.b16 %v1800, %v1799
        %v1888 = vpack.c.b16 %v1802, %v1801
        %v1889 = vpack.c.b16 %v1804, %v1803
        %v1890 = vpack.c.b16 %v1806, %v1805
        %v1891 = vpack.c.b16 %v1808, %v1807
        %v1892 = vpack.c.b16 %v1810, %v1809
        %v1893 = vpack.c.b16 %v1812, %v1811
        %v1894 = vpack.c.b16 %v1814, %v1813
        %v1895 = vpack.c.b16 %v1816, %v1815
        %v1896 = vpack.c.b16 %v1818, %v1817
        %v1897 = vpack.c.b16 %v1820, %v1819
        %v1898 = vpack.c.b16 %v1822, %v1821
        %v1899 = vpack.c.b16 %v1824, %v1823
        %v1900 = vpack.c.b16 %v1826, %v1825
        %v1901 = vpack.c.b16 %v1828, %v1827
        %v1902 = vpack.c.b16 %v1830, %v1829
        %1975 = vmatpush.bf16.msra.mxu0 %v1838
        %1976 = vmatpush.bf16.msra.mxu0 %v1837
        %1977 = vmatpush.bf16.msra.mxu0 %v1836
        %1978 = vmatpush.bf16.msra.mxu0 %v1835
        %1979 = vmatpush.bf16.msra.mxu0 %v1834
        %1980 = vmatpush.bf16.msra.mxu0 %v1833
        %1981 = vmatpush.bf16.msra.mxu0 %v1832
        %1982 = vmatpush.bf16.msra.mxu0 %v1831
        %1983 = vmatmul.bf16.gmra.mxu0 %v1291
        %v1984 = vpop.f32.mrf.mxu0
        %v1985 = vadd.f32 %v1541, %v1984
        %v1986 = vpop.f32.mrf.mxu0
        %v1987 = vadd.f32 %v1541, %v1986
        %1988 = vmatmul.bf16.gmra.mxu0 %v1292
        %v1989 = vpop.f32.mrf.mxu0
        %v1990 = vadd.f32 %v1541, %v1989
        %v1991 = vpop.f32.mrf.mxu0
        %v1992 = vadd.f32 %v1541, %v1991
        %1993 = vmatmul.bf16.gmra.mxu0 %v1293
        %v1994 = vpop.f32.mrf.mxu0
        %v1995 = vadd.f32 %v1541, %v1994
        %v1996 = vpop.f32.mrf.mxu0
        %v1997 = vadd.f32 %v1541, %v1996
        %1998 = vmatmul.bf16.gmra.mxu0 %v1294
        %v1999 = vpop.f32.mrf.mxu0
        %v2000 = vadd.f32 %v1541, %v1999
        %v2001 = vpop.f32.mrf.mxu0
        %v2002 = vadd.f32 %v1541, %v2001
        %2003 = vmatmul.bf16.gmra.mxu0 %v1295
        %v2004 = vpop.f32.mrf.mxu0
        %v2005 = vadd.f32 %v1541, %v2004
        %v2006 = vpop.f32.mrf.mxu0
        %v2007 = vadd.f32 %v1541, %v2006
        %2008 = vmatmul.bf16.gmra.mxu0 %v1296
        %v2009 = vpop.f32.mrf.mxu0
        %v2010 = vadd.f32 %v1541, %v2009
        %v2011 = vpop.f32.mrf.mxu0
        %v2012 = vadd.f32 %v1541, %v2011
        %2013 = vmatmul.bf16.gmra.mxu0 %v1297
        %v2014 = vpop.f32.mrf.mxu0
        %v2015 = vadd.f32 %v1541, %v2014
        %v2016 = vpop.f32.mrf.mxu0
        %v2017 = vadd.f32 %v1541, %v2016
        %2018 = vmatmul.bf16.gmra.mxu0 %v1298
        %v2019 = vpop.f32.mrf.mxu0
        %v2020 = vadd.f32 %v1541, %v2019
        %v2021 = vpop.f32.mrf.mxu0
        %v2022 = vadd.f32 %v1541, %v2021
        %2023 = vdwg.mxu0
        %2024 = vmatpush.bf16.msra.mxu0 %v1846
        %2025 = vmatpush.bf16.msra.mxu0 %v1845
        %2026 = vmatpush.bf16.msra.mxu0 %v1844
        %2027 = vmatpush.bf16.msra.mxu0 %v1843
        %2028 = vmatpush.bf16.msra.mxu0 %v1842
        %2029 = vmatpush.bf16.msra.mxu0 %v1841
        %2030 = vmatpush.bf16.msra.mxu0 %v1840
        %2031 = vmatpush.bf16.msra.mxu0 %v1839
        %2032 = vmatmul.bf16.gmra.mxu0 %v1323
        %v2033 = vpop.f32.mrf.mxu0
        %v2034 = vadd.f32 %v1985, %v2033
        %v2035 = vpop.f32.mrf.mxu0
        %v2036 = vadd.f32 %v1987, %v2035
        %2037 = vmatmul.bf16.gmra.mxu0 %v1324
        %v2038 = vpop.f32.mrf.mxu0
        %v2039 = vadd.f32 %v1990, %v2038
        %v2040 = vpop.f32.mrf.mxu0
        %v2041 = vadd.f32 %v1992, %v2040
        %2042 = vmatmul.bf16.gmra.mxu0 %v1325
        %v2043 = vpop.f32.mrf.mxu0
        %v2044 = vadd.f32 %v1995, %v2043
        %v2045 = vpop.f32.mrf.mxu0
        %v2046 = vadd.f32 %v1997, %v2045
        %2047 = vmatmul.bf16.gmra.mxu0 %v1326
        %v2048 = vpop.f32.mrf.mxu0
        %v2049 = vadd.f32 %v2000, %v2048
        %v2050 = vpop.f32.mrf.mxu0
        %v2051 = vadd.f32 %v2002, %v2050
        %2052 = vmatmul.bf16.gmra.mxu0 %v1327
        %v2053 = vpop.f32.mrf.mxu0
        %v2054 = vadd.f32 %v2005, %v2053
        %v2055 = vpop.f32.mrf.mxu0
        %v2056 = vadd.f32 %v2007, %v2055
        %2057 = vmatmul.bf16.gmra.mxu0 %v1328
        %v2058 = vpop.f32.mrf.mxu0
        %v2059 = vadd.f32 %v2010, %v2058
        %v2060 = vpop.f32.mrf.mxu0
        %v2061 = vadd.f32 %v2012, %v2060
        %2062 = vmatmul.bf16.gmra.mxu0 %v1329
        %v2063 = vpop.f32.mrf.mxu0
        %v2064 = vadd.f32 %v2015, %v2063
        %v2065 = vpop.f32.mrf.mxu0
        %v2066 = vadd.f32 %v2017, %v2065
        %2067 = vmatmul.bf16.gmra.mxu0 %v1330
        %v2068 = vpop.f32.mrf.mxu0
        %v2069 = vadd.f32 %v2020, %v2068
        %v2070 = vpop.f32.mrf.mxu0
        %v2071 = vadd.f32 %v2022, %v2070
        %2072 = vdwg.mxu0
        %2073 = vmatpush.bf16.msra.mxu0 %v1854
        %2074 = vmatpush.bf16.msra.mxu0 %v1853
        %2075 = vmatpush.bf16.msra.mxu0 %v1852
        %2076 = vmatpush.bf16.msra.mxu0 %v1851
        %2077 = vmatpush.bf16.msra.mxu0 %v1850
        %2078 = vmatpush.bf16.msra.mxu0 %v1849
        %2079 = vmatpush.bf16.msra.mxu0 %v1848
        %2080 = vmatpush.bf16.msra.mxu0 %v1847
        %2081 = vmatmul.bf16.gmra.mxu0 %v1355
        %v2082 = vpop.f32.mrf.mxu0
        %v2083 = vadd.f32 %v2034, %v2082
        %v2084 = vpop.f32.mrf.mxu0
        %v2085 = vadd.f32 %v2036, %v2084
        %2086 = vmatmul.bf16.gmra.mxu0 %v1356
        %v2087 = vpop.f32.mrf.mxu0
        %v2088 = vadd.f32 %v2039, %v2087
        %v2089 = vpop.f32.mrf.mxu0
        %v2090 = vadd.f32 %v2041, %v2089
        %2091 = vmatmul.bf16.gmra.mxu0 %v1357
        %v2092 = vpop.f32.mrf.mxu0
        %v2093 = vadd.f32 %v2044, %v2092
        %v2094 = vpop.f32.mrf.mxu0
        %v2095 = vadd.f32 %v2046, %v2094
        %2096 = vmatmul.bf16.gmra.mxu0 %v1358
        %v2097 = vpop.f32.mrf.mxu0
        %v2098 = vadd.f32 %v2049, %v2097
        %v2099 = vpop.f32.mrf.mxu0
        %v2100 = vadd.f32 %v2051, %v2099
        %2101 = vmatmul.bf16.gmra.mxu0 %v1359
        %v2102 = vpop.f32.mrf.mxu0
        %v2103 = vadd.f32 %v2054, %v2102
        %v2104 = vpop.f32.mrf.mxu0
        %v2105 = vadd.f32 %v2056, %v2104
        %2106 = vmatmul.bf16.gmra.mxu0 %v1360
        %v2107 = vpop.f32.mrf.mxu0
        %v2108 = vadd.f32 %v2059, %v2107
        %v2109 = vpop.f32.mrf.mxu0
        %v2110 = vadd.f32 %v2061, %v2109
        %2111 = vmatmul.bf16.gmra.mxu0 %v1361
        %v2112 = vpop.f32.mrf.mxu0
        %v2113 = vadd.f32 %v2064, %v2112
        %v2114 = vpop.f32.mrf.mxu0
        %v2115 = vadd.f32 %v2066, %v2114
        %2116 = vmatmul.bf16.gmra.mxu0 %v1362
        %v2117 = vpop.f32.mrf.mxu0
        %v2118 = vadd.f32 %v2069, %v2117
        %v2119 = vpop.f32.mrf.mxu0
        %v2120 = vadd.f32 %v2071, %v2119
        %2121 = vdwg.mxu0
        %2122 = vmatpush.bf16.msra.mxu0 %v1862
        %2123 = vmatpush.bf16.msra.mxu0 %v1861
        %2124 = vmatpush.bf16.msra.mxu0 %v1860
        %2125 = vmatpush.bf16.msra.mxu0 %v1859
        %2126 = vmatpush.bf16.msra.mxu0 %v1858
        %2127 = vmatpush.bf16.msra.mxu0 %v1857
        %2128 = vmatpush.bf16.msra.mxu0 %v1856
        %2129 = vmatpush.bf16.msra.mxu0 %v1855
        %2130 = vmatmul.bf16.gmra.mxu0 %v1292
        %v2131 = vpop.f32.mrf.mxu0
        %v2132 = vadd.f32 %v2083, %v2131
        %v2133 = vpop.f32.mrf.mxu0
        %v2134 = vadd.f32 %v2085, %v2133
        %2135 = vmatmul.bf16.gmra.mxu0 %v1293
        %v2136 = vpop.f32.mrf.mxu0
        %v2137 = vadd.f32 %v2088, %v2136
        %v2138 = vpop.f32.mrf.mxu0
        %v2139 = vadd.f32 %v2090, %v2138
        %2140 = vmatmul.bf16.gmra.mxu0 %v1294
        %v2141 = vpop.f32.mrf.mxu0
        %v2142 = vadd.f32 %v2093, %v2141
        %v2143 = vpop.f32.mrf.mxu0
        %v2144 = vadd.f32 %v2095, %v2143
        %2145 = vmatmul.bf16.gmra.mxu0 %v1295
        %v2146 = vpop.f32.mrf.mxu0
        %v2147 = vadd.f32 %v2098, %v2146
        %v2148 = vpop.f32.mrf.mxu0
        %v2149 = vadd.f32 %v2100, %v2148
        %2150 = vmatmul.bf16.gmra.mxu0 %v1296
        %v2151 = vpop.f32.mrf.mxu0
        %v2152 = vadd.f32 %v2103, %v2151
        %v2153 = vpop.f32.mrf.mxu0
        %v2154 = vadd.f32 %v2105, %v2153
        %2155 = vmatmul.bf16.gmra.mxu0 %v1297
        %v2156 = vpop.f32.mrf.mxu0
        %v2157 = vadd.f32 %v2108, %v2156
        %v2158 = vpop.f32.mrf.mxu0
        %v2159 = vadd.f32 %v2110, %v2158
        %2160 = vmatmul.bf16.gmra.mxu0 %v1298
        %v2161 = vpop.f32.mrf.mxu0
        %v2162 = vadd.f32 %v2113, %v2161
        %v2163 = vpop.f32.mrf.mxu0
        %v2164 = vadd.f32 %v2115, %v2163
        %2165 = vmatmul.bf16.gmra.mxu0 %v1373
        %v2166 = vpop.f32.mrf.mxu0
        %v2167 = vadd.f32 %v2118, %v2166
        %v2168 = vpop.f32.mrf.mxu0
        %v2169 = vadd.f32 %v2120, %v2168
        %2170 = vdwg.mxu0
        %2171 = vmatpush.bf16.msra.mxu0 %v1870
        %2172 = vmatpush.bf16.msra.mxu0 %v1869
        %2173 = vmatpush.bf16.msra.mxu0 %v1868
        %2174 = vmatpush.bf16.msra.mxu0 %v1867
        %2175 = vmatpush.bf16.msra.mxu0 %v1866
        %2176 = vmatpush.bf16.msra.mxu0 %v1865
        %2177 = vmatpush.bf16.msra.mxu0 %v1864
        %2178 = vmatpush.bf16.msra.mxu0 %v1863
        %2179 = vmatmul.bf16.gmra.mxu0 %v1324
        %v2180 = vpop.f32.mrf.mxu0
        %v2181 = vadd.f32 %v2132, %v2180
        %v2182 = vpop.f32.mrf.mxu0
        %v2183 = vadd.f32 %v2134, %v2182
        %2184 = vmatmul.bf16.gmra.mxu0 %v1325
        %v2185 = vpop.f32.mrf.mxu0
        %v2186 = vadd.f32 %v2137, %v2185
        %v2187 = vpop.f32.mrf.mxu0
        %v2188 = vadd.f32 %v2139, %v2187
        %2189 = vmatmul.bf16.gmra.mxu0 %v1326
        %v2190 = vpop.f32.mrf.mxu0
        %v2191 = vadd.f32 %v2142, %v2190
        %v2192 = vpop.f32.mrf.mxu0
        %v2193 = vadd.f32 %v2144, %v2192
        %2194 = vmatmul.bf16.gmra.mxu0 %v1327
        %v2195 = vpop.f32.mrf.mxu0
        %v2196 = vadd.f32 %v2147, %v2195
        %v2197 = vpop.f32.mrf.mxu0
        %v2198 = vadd.f32 %v2149, %v2197
        %2199 = vmatmul.bf16.gmra.mxu0 %v1328
        %v2200 = vpop.f32.mrf.mxu0
        %v2201 = vadd.f32 %v2152, %v2200
        %v2202 = vpop.f32.mrf.mxu0
        %v2203 = vadd.f32 %v2154, %v2202
        %2204 = vmatmul.bf16.gmra.mxu0 %v1329
        %v2205 = vpop.f32.mrf.mxu0
        %v2206 = vadd.f32 %v2157, %v2205
        %v2207 = vpop.f32.mrf.mxu0
        %v2208 = vadd.f32 %v2159, %v2207
        %2209 = vmatmul.bf16.gmra.mxu0 %v1330
        %v2210 = vpop.f32.mrf.mxu0
        %v2211 = vadd.f32 %v2162, %v2210
        %v2212 = vpop.f32.mrf.mxu0
        %v2213 = vadd.f32 %v2164, %v2212
        %2214 = vmatmul.bf16.gmra.mxu0 %v1377
        %v2215 = vpop.f32.mrf.mxu0
        %v2216 = vadd.f32 %v2167, %v2215
        %v2217 = vpop.f32.mrf.mxu0
        %v2218 = vadd.f32 %v2169, %v2217
        %2219 = vdwg.mxu0
        %2220 = vmatpush.bf16.msra.mxu0 %v1878
        %2221 = vmatpush.bf16.msra.mxu0 %v1877
        %2222 = vmatpush.bf16.msra.mxu0 %v1876
        %2223 = vmatpush.bf16.msra.mxu0 %v1875
        %2224 = vmatpush.bf16.msra.mxu0 %v1874
        %2225 = vmatpush.bf16.msra.mxu0 %v1873
        %2226 = vmatpush.bf16.msra.mxu0 %v1872
        %2227 = vmatpush.bf16.msra.mxu0 %v1871
        %2228 = vmatmul.bf16.gmra.mxu0 %v1356
        %v2229 = vpop.f32.mrf.mxu0
        %v2230 = vadd.f32 %v2181, %v2229
        %v2231 = vpop.f32.mrf.mxu0
        %v2232 = vadd.f32 %v2183, %v2231
        %2233 = vmatmul.bf16.gmra.mxu0 %v1357
        %v2234 = vpop.f32.mrf.mxu0
        %v2235 = vadd.f32 %v2186, %v2234
        %v2236 = vpop.f32.mrf.mxu0
        %v2237 = vadd.f32 %v2188, %v2236
        %2238 = vmatmul.bf16.gmra.mxu0 %v1358
        %v2239 = vpop.f32.mrf.mxu0
        %v2240 = vadd.f32 %v2191, %v2239
        %v2241 = vpop.f32.mrf.mxu0
        %v2242 = vadd.f32 %v2193, %v2241
        %2243 = vmatmul.bf16.gmra.mxu0 %v1359
        %v2244 = vpop.f32.mrf.mxu0
        %v2245 = vadd.f32 %v2196, %v2244
        %v2246 = vpop.f32.mrf.mxu0
        %v2247 = vadd.f32 %v2198, %v2246
        %2248 = vmatmul.bf16.gmra.mxu0 %v1360
        %v2249 = vpop.f32.mrf.mxu0
        %v2250 = vadd.f32 %v2201, %v2249
        %v2251 = vpop.f32.mrf.mxu0
        %v2252 = vadd.f32 %v2203, %v2251
        %2253 = vmatmul.bf16.gmra.mxu0 %v1361
        %v2254 = vpop.f32.mrf.mxu0
        %v2255 = vadd.f32 %v2206, %v2254
        %v2256 = vpop.f32.mrf.mxu0
        %v2257 = vadd.f32 %v2208, %v2256
        %2258 = vmatmul.bf16.gmra.mxu0 %v1362
        %v2259 = vpop.f32.mrf.mxu0
        %v2260 = vadd.f32 %v2211, %v2259
        %v2261 = vpop.f32.mrf.mxu0
        %v2262 = vadd.f32 %v2213, %v2261
        %2263 = vmatmul.bf16.gmra.mxu0 %v1381
        %v2264 = vpop.f32.mrf.mxu0
        %v2265 = vadd.f32 %v2216, %v2264
        %v2266 = vpop.f32.mrf.mxu0
        %v2267 = vadd.f32 %v2218, %v2266
        %2268 = vdwg.mxu0
        %2269 = vmatpush.bf16.msra.mxu0 %v1886
        %2270 = vmatpush.bf16.msra.mxu0 %v1885
        %2271 = vmatpush.bf16.msra.mxu0 %v1884
        %2272 = vmatpush.bf16.msra.mxu0 %v1883
        %2273 = vmatpush.bf16.msra.mxu0 %v1882
        %2274 = vmatpush.bf16.msra.mxu0 %v1881
        %2275 = vmatpush.bf16.msra.mxu0 %v1880
        %2276 = vmatpush.bf16.msra.mxu0 %v1879
        %2277 = vmatmul.bf16.gmra.mxu0 %v1293
        %v2278 = vpop.f32.mrf.mxu0
        %v2279 = vadd.f32 %v2230, %v2278
        %v2280 = vpop.f32.mrf.mxu0
        %v2281 = vadd.f32 %v2232, %v2280
        %2282 = vmatmul.bf16.gmra.mxu0 %v1294
        %v2283 = vpop.f32.mrf.mxu0
        %v2284 = vadd.f32 %v2235, %v2283
        %v2285 = vpop.f32.mrf.mxu0
        %v2286 = vadd.f32 %v2237, %v2285
        %2287 = vmatmul.bf16.gmra.mxu0 %v1295
        %v2288 = vpop.f32.mrf.mxu0
        %v2289 = vadd.f32 %v2240, %v2288
        %v2290 = vpop.f32.mrf.mxu0
        %v2291 = vadd.f32 %v2242, %v2290
        %2292 = vmatmul.bf16.gmra.mxu0 %v1296
        %v2293 = vpop.f32.mrf.mxu0
        %v2294 = vadd.f32 %v2245, %v2293
        %v2295 = vpop.f32.mrf.mxu0
        %v2296 = vadd.f32 %v2247, %v2295
        %2297 = vmatmul.bf16.gmra.mxu0 %v1297
        %v2298 = vpop.f32.mrf.mxu0
        %v2299 = vadd.f32 %v2250, %v2298
        %v2300 = vpop.f32.mrf.mxu0
        %v2301 = vadd.f32 %v2252, %v2300
        %2302 = vmatmul.bf16.gmra.mxu0 %v1298
        %v2303 = vpop.f32.mrf.mxu0
        %v2304 = vadd.f32 %v2255, %v2303
        %v2305 = vpop.f32.mrf.mxu0
        %v2306 = vadd.f32 %v2257, %v2305
        %2307 = vmatmul.bf16.gmra.mxu0 %v1373
        %v2308 = vpop.f32.mrf.mxu0
        %v2309 = vadd.f32 %v2260, %v2308
        %v2310 = vpop.f32.mrf.mxu0
        %v2311 = vadd.f32 %v2262, %v2310
        %2312 = vmatmul.bf16.gmra.mxu0 %v1385
        %v2313 = vpop.f32.mrf.mxu0
        %v2314 = vadd.f32 %v2265, %v2313
        %v2315 = vpop.f32.mrf.mxu0
        %v2316 = vadd.f32 %v2267, %v2315
        %2317 = vdwg.mxu0
        %2318 = vmatpush.bf16.msra.mxu0 %v1894
        %2319 = vmatpush.bf16.msra.mxu0 %v1893
        %2320 = vmatpush.bf16.msra.mxu0 %v1892
        %2321 = vmatpush.bf16.msra.mxu0 %v1891
        %2322 = vmatpush.bf16.msra.mxu0 %v1890
        %2323 = vmatpush.bf16.msra.mxu0 %v1889
        %2324 = vmatpush.bf16.msra.mxu0 %v1888
        %2325 = vmatpush.bf16.msra.mxu0 %v1887
        %2326 = vmatmul.bf16.gmra.mxu0 %v1325
        %v2327 = vpop.f32.mrf.mxu0
        %v2328 = vadd.f32 %v2279, %v2327
        %v2329 = vpop.f32.mrf.mxu0
        %v2330 = vadd.f32 %v2281, %v2329
        %2331 = vmatmul.bf16.gmra.mxu0 %v1326
        %v2332 = vpop.f32.mrf.mxu0
        %v2333 = vadd.f32 %v2284, %v2332
        %v2334 = vpop.f32.mrf.mxu0
        %v2335 = vadd.f32 %v2286, %v2334
        %2336 = vmatmul.bf16.gmra.mxu0 %v1327
        %v2337 = vpop.f32.mrf.mxu0
        %v2338 = vadd.f32 %v2289, %v2337
        %v2339 = vpop.f32.mrf.mxu0
        %v2340 = vadd.f32 %v2291, %v2339
        %2341 = vmatmul.bf16.gmra.mxu0 %v1328
        %v2342 = vpop.f32.mrf.mxu0
        %v2343 = vadd.f32 %v2294, %v2342
        %v2344 = vpop.f32.mrf.mxu0
        %v2345 = vadd.f32 %v2296, %v2344
        %2346 = vmatmul.bf16.gmra.mxu0 %v1329
        %v2347 = vpop.f32.mrf.mxu0
        %v2348 = vadd.f32 %v2299, %v2347
        %v2349 = vpop.f32.mrf.mxu0
        %v2350 = vadd.f32 %v2301, %v2349
        %2351 = vmatmul.bf16.gmra.mxu0 %v1330
        %v2352 = vpop.f32.mrf.mxu0
        %v2353 = vadd.f32 %v2304, %v2352
        %v2354 = vpop.f32.mrf.mxu0
        %v2355 = vadd.f32 %v2306, %v2354
        %2356 = vmatmul.bf16.gmra.mxu0 %v1377
        %v2357 = vpop.f32.mrf.mxu0
        %v2358 = vadd.f32 %v2309, %v2357
        %v2359 = vpop.f32.mrf.mxu0
        %v2360 = vadd.f32 %v2311, %v2359
        %2361 = vmatmul.bf16.gmra.mxu0 %v1389
        %v2362 = vpop.f32.mrf.mxu0
        %v2363 = vadd.f32 %v2314, %v2362
        %v2364 = vpop.f32.mrf.mxu0
        %v2365 = vadd.f32 %v2316, %v2364
        %2366 = vdwg.mxu0
        %2367 = vmatpush.bf16.msra.mxu0 %v1902
        %2368 = vmatpush.bf16.msra.mxu0 %v1901
        %2369 = vmatpush.bf16.msra.mxu0 %v1900
        %2370 = vmatpush.bf16.msra.mxu0 %v1899
        %2371 = vmatpush.bf16.msra.mxu0 %v1898
        %2372 = vmatpush.bf16.msra.mxu0 %v1897
        %2373 = vmatpush.bf16.msra.mxu0 %v1896
        %2374 = vmatpush.bf16.msra.mxu0 %v1895
        %2375 = vmatmul.bf16.gmra.mxu0 %v1357
        %v2376 = vpop.f32.mrf.mxu0
        %v2377 = vadd.f32 %v2328, %v2376
        %v2378 = vpop.f32.mrf.mxu0
        %v2379 = vadd.f32 %v2330, %v2378
        %2380 = vmatmul.bf16.gmra.mxu0 %v1358
        %v2381 = vpop.f32.mrf.mxu0
        %v2382 = vadd.f32 %v2333, %v2381
        %v2383 = vpop.f32.mrf.mxu0
        %v2384 = vadd.f32 %v2335, %v2383
        %2385 = vmatmul.bf16.gmra.mxu0 %v1359
        %v2386 = vpop.f32.mrf.mxu0
        %v2387 = vadd.f32 %v2338, %v2386
        %v2388 = vpop.f32.mrf.mxu0
        %v2389 = vadd.f32 %v2340, %v2388
        %2390 = vmatmul.bf16.gmra.mxu0 %v1360
        %v2391 = vpop.f32.mrf.mxu0
        %v2392 = vadd.f32 %v2343, %v2391
        %v2393 = vpop.f32.mrf.mxu0
        %v2394 = vadd.f32 %v2345, %v2393
        %2395 = vmatmul.bf16.gmra.mxu0 %v1361
        %v2396 = vpop.f32.mrf.mxu0
        %v2397 = vadd.f32 %v2348, %v2396
        %v2398 = vpop.f32.mrf.mxu0
        %v2399 = vadd.f32 %v2350, %v2398
        %2400 = vmatmul.bf16.gmra.mxu0 %v1362
        %v2401 = vpop.f32.mrf.mxu0
        %v2402 = vadd.f32 %v2353, %v2401
        %v2403 = vpop.f32.mrf.mxu0
        %v2404 = vadd.f32 %v2355, %v2403
        %2405 = vmatmul.bf16.gmra.mxu0 %v1381
        %v2406 = vpop.f32.mrf.mxu0
        %v2407 = vadd.f32 %v2358, %v2406
        %v2408 = vpop.f32.mrf.mxu0
        %v2409 = vadd.f32 %v2360, %v2408
        %2410 = vmatmul.bf16.gmra.mxu0 %v1393
        %v2411 = vpop.f32.mrf.mxu0
        %v2412 = vadd.f32 %v2363, %v2411
        %v2413 = vpop.f32.mrf.mxu0
        %v2414 = vadd.f32 %v2365, %v2413
        %2415 = vdwg.mxu0
        %v2416 = vmax.f32 %v2377, 0.0
        %v2417 = vmax.f32 %v2379, 0.0
        %v2418 = vmax.f32 %v2382, 0.0
        %v2419 = vmax.f32 %v2384, 0.0
        %v2420 = vmax.f32 %v2387, 0.0
        %v2421 = vmax.f32 %v2389, 0.0
        %v2422 = vmax.f32 %v2392, 0.0
        %v2423 = vmax.f32 %v2394, 0.0
        %v2424 = vmax.f32 %v2397, 0.0
        %v2425 = vmax.f32 %v2399, 0.0
        %v2426 = vmax.f32 %v2402, 0.0
        %v2427 = vmax.f32 %v2404, 0.0
        %v2428 = vmax.f32 %v2407, 0.0
        %v2429 = vmax.f32 %v2409, 0.0
        %v2430 = vmax.f32 %v2412, 0.0
        %v2431 = vmax.f32 %v2414, 0.0
        %2432 = vst [vmem:[%s295] sm:$0xff] %v2416
        %2433 = vst [vmem:[%s295 + $0x8] sm:$0xff] %v2417
        %2434 = vst [vmem:[%s295 + $0x10] sm:$0xff] %v2418
        %2435 = vst [vmem:[%s295 + $0x18] sm:$0xff] %v2419
        %2436 = vst [vmem:[%s295 + $0x20] sm:$0xff] %v2420
        %2437 = vst [vmem:[%s295 + $0x28] sm:$0xff] %v2421
        %2438 = vst [vmem:[%s295 + $0x30] sm:$0xff] %v2422
        %2439 = vst [vmem:[%s295 + $0x38] sm:$0xff] %v2423
        %2440 = vst [vmem:[%s295 + $0x40] sm:$0xff] %v2424
        %2441 = vst [vmem:[%s295 + $0x48] sm:$0xff] %v2425
        %2442 = vst [vmem:[%s295 + $0x50] sm:$0xff] %v2426
        %2443 = vst [vmem:[%s295 + $0x58] sm:$0xff] %v2427
        %2444 = vst [vmem:[%s295 + $0x60] sm:$0xff] %v2428
        %2445 = vst [vmem:[%s295 + $0x68] sm:$0xff] %v2429
        %2446 = vst [vmem:[%s295 + $0x70] sm:$0xff] %v2430
        %2447 = vst [vmem:[%s295 + $0x78] sm:$0xff] %v2431
        %s2448 = sand.u32 %s157, 1
        %s2449 = scalar_lea.sflag [#allocation5], %s2448
        %s2450 = sand.u32 %s157, 1
        %s2451 = smul.addr %s2450, 128
        %s2452 = scalar_lea.vmem [#allocation9], %s2451
        // Predicated region
        $region61: #{tpu_custom_call.1} parent=39 // pred_check
          %p2453 = pneg %p167
        $region62: #{tpu_custom_call.1} parent=39 // pred_check_branch
          %2455 = sbr.rel (%p2453) target = $region64
        $region63: #{tpu_custom_call.1} parent=39 // pred_region
          %s2456 = smul.u32 8, %s28
          %2458 = vsyncadd %s2449, 0
          %s2459 = smul.addr %s2456, 2
          %s2460 = smul.addr %s27, 32
          %s2461 = sadd.s32 %s2459, %s2460
          %s2462 = smul.addr %s2461, 8
          %s2463 = scalar_lea.hbm %s5, %s2462
          %s2464 = sshll.u32 %s2452, 4
          %s2465 = int_to_ptr.vmem [resolvable:$true] %s2464
          %s2466 = sshll.u32 %s2463, 4
          %s2467 = int_to_ptr.hbm [resolvable:$true] %s2466
          %2472 = dma.vmem_to_hbm [thread:$0]  %s2465, 2048, %s2467, %s2449, 128, 128, 8
        $region64: #{tpu_custom_call.1} parent=39 // pred_fallthru
          _
      $region40: #{tpu_custom_call.1} parent=5 // pred_fallthru
        _
      %p2473 = scmp.le.s32.totalorder 2, %s18
      // Predicated region
      $region65: #{tpu_custom_call.1} parent=5 // pred_check
        %p2474 = pneg %p2473
      $region66: #{tpu_custom_call.1} parent=5 // pred_check_branch
        %2476 = sbr.rel (%p2474) target = $region68
      $region67: #{tpu_custom_call.1} parent=5 // pred_region
        %s2477 = ssub.s32 %s18, 2
        // Predicated region
        $region69: #{tpu_custom_call.1} parent=67 // pred_check
          %p2478 = pneg %p173
        $region70: #{tpu_custom_call.1} parent=67 // pred_check_branch
          %2480 = sbr.rel (%p2478) target = $region72
        $region71: #{tpu_custom_call.1} parent=67 // pred_region
          %s2481 = sand.u32 %s158, 1
          %s2482 = scalar_lea.sflag [#allocation5], %s2481
          %s2483 = sand.u32 %s158, 1
          %s2484 = smul.addr %s2483, 128
          %s2485 = scalar_lea.vmem [#allocation9], %s2484
          %2487 = dma.done %s2482, 2048
        $region72: #{tpu_custom_call.1} parent=67 // pred_fallthru
          _
      $region68: #{tpu_custom_call.1} parent=5 // pred_fallthru
        _
    $region6: #{tpu_custom_call.1} parent=1 // loop_footer
      %s22 = sadd.s32 1, %s18
    $region7: #{tpu_custom_call.1} parent=1 // loop_footer_branch
      %17 = sbr.rel target = $region3
    $region8: #{tpu_custom_call.1} parent=1 // loop_exit
      _
    %2488 = vsyncpa [#allocation4], 1
    %s2489 = scalar_lea.sflag [#allocation4], 1
    %2490 = vsyncpa %s2489, 1
    %2491 = vsyncpa [#allocation7], 1
    %2492 = vsyncpa [#allocation5], 1
    %s2493 = scalar_lea.sflag [#allocation5], 1
    %2494 = vsyncpa %s2493, 1

</llo_original>
